<compile_context>
chip_gen: v7x
topology: tpu7x:2x2x1
jax: 0.10.0
libtpu: 0.0.40
codegen_flags: <defaults>
</compile_context>

<pallas_src>
import functools

import jax
import jax.numpy as jnp
from jax.experimental import pallas as pl
from jax.experimental.pallas import tpu as pltpu

# Model hyper-parameters (scaled-down but structurally identical to the PyTorch
# module: the spec uses hidden=100, layers=10 — here 32/2 for the small test).
INPUT_SIZE = 1
HIDDEN_SIZE = 32      # 4*H = 128 -> the gate vector is exactly one lane-width
NUM_LAYERS = 2
NUM_CLASSES = 1

BATCH = 2
BATCH_PAD = 8         # pad batch to a full 8-sublane tile inside the kernel
SEQ_LEN = 8


# ----------------------------------------------------------------------------
# Fused Pallas kernel: stacked LSTM (h0 = c0 = 0) + last-timestep FC head
# ----------------------------------------------------------------------------
def fused_lstm_kernel(num_layers, seq_len, batch, batch_pad, hidden,
                      x_ref, w_ih0_ref, b0_ref, *refs):
    """Whole forward pass in a single kernel invocation (no grid).

    x_ref     : (BP, T)  f32  inputs; batch on sublanes (rows B..BP-1 zero pad),
                              time on lanes
    w_ih0_ref : (1, 4H)  f32  layer-0 input weights (input_size == 1 -> one row)
    b0_ref    : (1, 4H)  f32  layer-0 combined bias (b_ih + b_hh)
    refs      : w_hh_t[0..L-1]        each (H, 4H) bf16
                (w_ih_t, b)[1..L-1]   each ((H, 4H) bf16, (1, 4H) f32)
                fc_w_t (H, C) f32, fc_b (1, C) f32
                o_ref (B, C) f32      output
    """
    L, T, B, BP, H = num_layers, seq_len, batch, batch_pad, hidden

    w_hh = [refs[l][...] for l in range(L)]          # bf16, loaded once
    idx = L
    w_ih, b = [None], [None]                         # layer 0 handled above
    for _ in range(1, L):
        w_ih.append(refs[idx][...])                  # bf16 (H, 4H)
        b.append(refs[idx + 1][...])                 # f32  (1, 4H)
        idx += 2
    fc_w, fc_b = refs[idx][...], refs[idx + 1][...]
    o_ref = refs[idx + 2]

    x = x_ref[...]                                   # (BP, T)  f32
    w_ih0 = w_ih0_ref[...]                           # (1, 4H)  f32
    b0 = b0_ref[...]                                 # (1, 4H)  f32

    h = [jnp.zeros((BP, H), jnp.float32) for _ in range(L)]   # h0 = 0
    c = [jnp.zeros((BP, H), jnp.float32) for _ in range(L)]   # c0 = 0

    # Wavefront over (t, layer).  The recurrence itself must stay sequential,
    # but layer-l step t+1 is independent of layer-(l+1) step t, so the LLO
    # scheduler can overlap the per-layer chains (~T+L-1 dependent steps).
    for t in range(T):                               # fully unrolled (T small)
        for l in range(L):
            if l == 0:
                # input_size == 1: the input projection is a per-row scalar
                # broadcast multiply-add on the VPU, off the recurrent edge.
                gx = x[:, t:t + 1] * w_ih0 + b0                      # (BP, 4H)
            else:
                # Inter-layer projection uses h[l-1] of THIS timestep.
                gx = jnp.dot(h[l - 1].astype(jnp.bfloat16), w_ih[l],
                             preferred_element_type=jnp.float32) + b[l]
            gates = gx + jnp.dot(h[l].astype(jnp.bfloat16), w_hh[l],
                                 preferred_element_type=jnp.float32)  # (BP, 4H)

            # Two full-vreg EUP calls; the 32-lane per-gate slices of the
            # results relayout via XLU rotates (off the VALU path).
            sig = jax.nn.sigmoid(gates)
            th = jnp.tanh(gates)
            # PyTorch gate order: i, f, g, o
            i_g = sig[:, 0 * H:1 * H]
            f_g = sig[:, 1 * H:2 * H]
            g_g = th[:, 2 * H:3 * H]
            o_g = sig[:, 3 * H:4 * H]
            c[l] = f_g * c[l] + i_g * g_g
            h[l] = o_g * jnp.tanh(c[l])

    # FC head fused as the epilogue; only the (B, C) result leaves the kernel.
    out = jnp.dot(h[L - 1], fc_w, preferred_element_type=jnp.float32) + fc_b
    o_ref[...] = out[:B, :]


# ----------------------------------------------------------------------------
# Wrapper
# ----------------------------------------------------------------------------
@jax.jit
def rnn_forward(x, params):
    """Equivalent of RNN.forward: stacked LSTM (h0=c0=0) -> last timestep -> fc."""
    B, T, _ = x.shape
    H, L, C, BP = HIDDEN_SIZE, NUM_LAYERS, NUM_CLASSES, BATCH_PAD
    layers = params["lstm"]

    # (B, T, 1) -> (BP, T): batch on sublanes, padded to a full 8-row tile,
    # time on lanes.  This pad and the bf16 weight casts are the only HLO ops
    # around the pallas_call (the layer-0 projection itself moved in-kernel).
    x_bt = x[..., 0].astype(jnp.float32)
    x_pad = jnp.zeros((BP, T), jnp.float32).at[:B, :].set(x_bt)

    inputs = [x_pad, layers[0]["w_ih_t"], layers[0]["b"]]
    inputs += [layers[l]["w_hh_t"].astype(jnp.bfloat16) for l in range(L)]
    for l in range(1, L):
        inputs += [layers[l]["w_ih_t"].astype(jnp.bfloat16), layers[l]["b"]]
    inputs += [params["fc_w_t"], params["fc_b"]]

    # Advisory cost hint for the XLA scheduler around the custom call.
    flops = 2 * BP * H * 4 * H * T * (2 * L - 1) + 2 * BP * H * C
    transcendentals = T * L * BP * (2 * 4 * H + H)
    bytes_accessed = int(sum(a.size * a.dtype.itemsize for a in inputs)) + B * C * 4
    cost = pl.CostEstimate(flops=flops, transcendentals=transcendentals,
                           bytes_accessed=bytes_accessed)

    vmem = pl.BlockSpec(memory_space=pltpu.MemorySpace.VMEM)
    kernel = functools.partial(fused_lstm_kernel, L, T, B, BP, H)
    # NOTE(v7x): latency-bound tiny kernel -> no grid, no tiling, no pipelining;
    # second TensorCore is idle at B=2 (shard batch, never time, if B >= 16).
    return pl.pallas_call(
        kernel,
        out_shape=jax.ShapeDtypeStruct((B, C), jnp.float32),
        in_specs=[vmem] * len(inputs),
        out_specs=vmem,
        cost_estimate=cost,
    )(*inputs)


# ----------------------------------------------------------------------------
# Deterministic parameter init (PyTorch-style U(-1/sqrt(H), 1/sqrt(H)))
# ----------------------------------------------------------------------------
def init_params(key):
    bound = 1.0 / jnp.sqrt(jnp.float32(HIDDEN_SIZE))
    params = {"lstm": []}
    for layer in range(NUM_LAYERS):
        d_in = INPUT_SIZE if layer == 0 else HIDDEN_SIZE
        key, k1, k2, k3, k4 = jax.random.split(key, 5)
        w_ih = jax.random.uniform(k1, (4 * HIDDEN_SIZE, d_in), jnp.float32,
                                  -bound, bound)
        w_hh = jax.random.uniform(k2, (4 * HIDDEN_SIZE, HIDDEN_SIZE), jnp.float32,
                                  -bound, bound)
        b_ih = jax.random.uniform(k3, (4 * HIDDEN_SIZE,), jnp.float32,
                                  -bound, bound)
        b_hh = jax.random.uniform(k4, (4 * HIDDEN_SIZE,), jnp.float32,
                                  -bound, bound)
        params["lstm"].append({
            "w_ih_t": w_ih.T,                       # (D, 4H)
            "w_hh_t": w_hh.T,                       # (H, 4H)
            "b": (b_ih + b_hh)[None, :],            # (1, 4H)
        })
    key, k1, k2 = jax.random.split(key, 3)
    fc_w = jax.random.uniform(k1, (NUM_CLASSES, HIDDEN_SIZE), jnp.float32,
                              -bound, bound)
    fc_b = jax.random.uniform(k2, (NUM_CLASSES,), jnp.float32, -bound, bound)
    params["fc_w_t"] = fc_w.T                       # (H, C)
    params["fc_b"] = fc_b[None, :]                  # (1, C)
    return params


# Pure-JAX f32 reference (same math) for a sanity check.
def rnn_forward_ref(x, params):
    seq = jnp.transpose(x, (1, 0, 2)).astype(jnp.float32)   # (T, B, D)
    B = x.shape[0]
    H = HIDDEN_SIZE
    for layer in params["lstm"]:
        h = jnp.zeros((B, H), jnp.float32)
        c = jnp.zeros((B, H), jnp.float32)

        def step(carry, x_t, layer=layer):
            h, c = carry
            gates = x_t @ layer["w_ih_t"] + h @ layer["w_hh_t"] + layer["b"]
            i = jax.nn.sigmoid(gates[:, 0 * H:1 * H])
            f = jax.nn.sigmoid(gates[:, 1 * H:2 * H])
            g = jnp.tanh(gates[:, 2 * H:3 * H])
            o = jax.nn.sigmoid(gates[:, 3 * H:4 * H])
            c = f * c + i * g
            h = o * jnp.tanh(c)
            return (h, c), h

        (_, _), seq = jax.lax.scan(step, (h, c), seq)
    return seq[-1] @ params["fc_w_t"] + params["fc_b"]


if __name__ == "__main__":
    key = jax.random.PRNGKey(0)
    key, xk = jax.random.split(key)
    x = jax.random.normal(xk, (BATCH, SEQ_LEN, INPUT_SIZE), jnp.float32)

    params = init_params(key)

    out = rnn_forward(x, params)
    jax.block_until_ready(out)
    assert out.shape == (BATCH, NUM_CLASSES), out.shape

    ref = rnn_forward_ref(x, params)
    # Kernel uses bf16 MXU operands (single-pass matmul on the serial
    # recurrence) with f32 accumulation; compare against the f32 reference
    # with a correspondingly loosened tolerance.
    assert jnp.allclose(out, ref, atol=2e-2, rtol=2e-2), (out, ref)

    print("KERNEL_OK")
</pallas_src>

<mosaic_0001>
module attributes {stable_mosaic.version = 11 : i64} {
  func.func @fused_lstm_kernel(%arg0: memref<8x8xf32, #tpu.memory_space<vmem>>, %arg1: memref<1x128xf32, #tpu.memory_space<vmem>>, %arg2: memref<1x128xf32, #tpu.memory_space<vmem>>, %arg3: memref<32x128xbf16, #tpu.memory_space<vmem>>, %arg4: memref<32x128xbf16, #tpu.memory_space<vmem>>, %arg5: memref<32x128xbf16, #tpu.memory_space<vmem>>, %arg6: memref<1x128xf32, #tpu.memory_space<vmem>>, %arg7: memref<32x1xf32, #tpu.memory_space<vmem>>, %arg8: memref<1x1xf32, #tpu.memory_space<vmem>>, %arg9: memref<2x1xf32, #tpu.memory_space<vmem>>) attributes {dimension_semantics = [], scalar_prefetch = 0 : i64, scratch_operands = 0 : i64, tpu.core_type = #tpu.core_type<tc>} {
    %c0 = arith.constant 0 : index
    %c0_0 = arith.constant 0 : index
    %0 = vector.load %arg3[%c0, %c0_0] : memref<32x128xbf16, #tpu.memory_space<vmem>>, vector<32x128xbf16>
    %c0_1 = arith.constant 0 : index
    %c0_2 = arith.constant 0 : index
    %1 = vector.load %arg4[%c0_1, %c0_2] : memref<32x128xbf16, #tpu.memory_space<vmem>>, vector<32x128xbf16>
    %c0_3 = arith.constant 0 : index
    %c0_4 = arith.constant 0 : index
    %2 = vector.load %arg5[%c0_3, %c0_4] : memref<32x128xbf16, #tpu.memory_space<vmem>>, vector<32x128xbf16>
    %c0_5 = arith.constant 0 : index
    %c0_6 = arith.constant 0 : index
    %3 = vector.load %arg6[%c0_5, %c0_6] : memref<1x128xf32, #tpu.memory_space<vmem>>, vector<1x128xf32>
    %c0_7 = arith.constant 0 : index
    %c0_8 = arith.constant 0 : index
    %4 = vector.load %arg7[%c0_7, %c0_8] : memref<32x1xf32, #tpu.memory_space<vmem>>, vector<32x1xf32>
    %c0_9 = arith.constant 0 : index
    %c0_10 = arith.constant 0 : index
    %5 = vector.load %arg8[%c0_9, %c0_10] : memref<1x1xf32, #tpu.memory_space<vmem>>, vector<1x1xf32>
    %c0_11 = arith.constant 0 : index
    %c0_12 = arith.constant 0 : index
    %6 = vector.load %arg0[%c0_11, %c0_12] : memref<8x8xf32, #tpu.memory_space<vmem>>, vector<8x8xf32>
    %c0_13 = arith.constant 0 : index
    %c0_14 = arith.constant 0 : index
    %7 = vector.load %arg1[%c0_13, %c0_14] : memref<1x128xf32, #tpu.memory_space<vmem>>, vector<1x128xf32>
    %c0_15 = arith.constant 0 : index
    %c0_16 = arith.constant 0 : index
    %8 = vector.load %arg2[%c0_15, %c0_16] : memref<1x128xf32, #tpu.memory_space<vmem>>, vector<1x128xf32>
    %cst = arith.constant 0.000000e+00 : f32
    %9 = vector.broadcast %cst : f32 to vector<8x32xf32>
    %cst_17 = arith.constant 0.000000e+00 : f32
    %10 = vector.broadcast %cst_17 : f32 to vector<8x32xf32>
    %cst_18 = arith.constant 0.000000e+00 : f32
    %11 = vector.broadcast %cst_18 : f32 to vector<8x32xf32>
    %cst_19 = arith.constant 0.000000e+00 : f32
    %12 = vector.broadcast %cst_19 : f32 to vector<8x32xf32>
    %13 = vector.extract_strided_slice %6 {offsets = [0, 0], sizes = [8, 1], strides = [1, 1]} : vector<8x8xf32> to vector<8x1xf32>
    %14 = vector.broadcast %13 : vector<8x1xf32> to vector<8x128xf32>
    %15 = vector.broadcast %7 : vector<1x128xf32> to vector<8x128xf32>
    %16 = arith.mulf %14, %15 : vector<8x128xf32>
    %17 = vector.broadcast %8 : vector<1x128xf32> to vector<8x128xf32>
    %18 = arith.addf %16, %17 : vector<8x128xf32>
    %19 = arith.truncf %9 : vector<8x32xf32> to vector<8x32xbf16>
    %cst_20 = arith.constant dense<0.000000e+00> : vector<8x128xf32>
    %20 = tpu.matmul %19, %0, %cst_20 {dimension_numbers = #tpu.dot_dimension_numbers<[1], [0], [0], [1], [0, 0, 1, 1], [], []>} : vector<8x32xbf16>, vector<32x128xbf16>, vector<8x128xf32> -> vector<8x128xf32>
    %21 = arith.addf %18, %20 : vector<8x128xf32>
    %22 = arith.negf %21 : vector<8x128xf32>
    %23 = math.exp %22 : vector<8x128xf32>
    %cst_21 = arith.constant 1.000000e+00 : f32
    %24 = vector.broadcast %cst_21 : f32 to vector<8x128xf32>
    %25 = arith.addf %24, %23 : vector<8x128xf32>
    %26 = arith.divf %24, %25 : vector<8x128xf32>
    %27 = math.tanh %21 : vector<8x128xf32>
    %28 = vector.extract_strided_slice %26 {offsets = [0, 0], sizes = [8, 32], strides = [1, 1]} : vector<8x128xf32> to vector<8x32xf32>
    %29 = vector.extract_strided_slice %26 {offsets = [0, 32], sizes = [8, 32], strides = [1, 1]} : vector<8x128xf32> to vector<8x32xf32>
    %30 = vector.extract_strided_slice %27 {offsets = [0, 64], sizes = [8, 32], strides = [1, 1]} : vector<8x128xf32> to vector<8x32xf32>
    %31 = vector.extract_strided_slice %26 {offsets = [0, 96], sizes = [8, 32], strides = [1, 1]} : vector<8x128xf32> to vector<8x32xf32>
    %32 = arith.mulf %29, %11 : vector<8x32xf32>
    %33 = arith.mulf %28, %30 : vector<8x32xf32>
    %34 = arith.addf %32, %33 : vector<8x32xf32>
    %35 = math.tanh %34 : vector<8x32xf32>
    %36 = arith.mulf %31, %35 : vector<8x32xf32>
    %37 = arith.truncf %36 : vector<8x32xf32> to vector<8x32xbf16>
    %cst_22 = arith.constant dense<0.000000e+00> : vector<8x128xf32>
    %38 = tpu.matmul %37, %2, %cst_22 {dimension_numbers = #tpu.dot_dimension_numbers<[1], [0], [0], [1], [0, 0, 1, 1], [], []>} : vector<8x32xbf16>, vector<32x128xbf16>, vector<8x128xf32> -> vector<8x128xf32>
    %39 = vector.broadcast %3 : vector<1x128xf32> to vector<8x128xf32>
    %40 = arith.addf %38, %39 : vector<8x128xf32>
    %41 = arith.truncf %10 : vector<8x32xf32> to vector<8x32xbf16>
    %cst_23 = arith.constant dense<0.000000e+00> : vector<8x128xf32>
    %42 = tpu.matmul %41, %1, %cst_23 {dimension_numbers = #tpu.dot_dimension_numbers<[1], [0], [0], [1], [0, 0, 1, 1], [], []>} : vector<8x32xbf16>, vector<32x128xbf16>, vector<8x128xf32> -> vector<8x128xf32>
    %43 = arith.addf %40, %42 : vector<8x128xf32>
    %44 = arith.negf %43 : vector<8x128xf32>
    %45 = math.exp %44 : vector<8x128xf32>
    %cst_24 = arith.constant 1.000000e+00 : f32
    %46 = vector.broadcast %cst_24 : f32 to vector<8x128xf32>
    %47 = arith.addf %46, %45 : vector<8x128xf32>
    %48 = arith.divf %46, %47 : vector<8x128xf32>
    %49 = math.tanh %43 : vector<8x128xf32>
    %50 = vector.extract_strided_slice %48 {offsets = [0, 0], sizes = [8, 32], strides = [1, 1]} : vector<8x128xf32> to vector<8x32xf32>
    %51 = vector.extract_strided_slice %48 {offsets = [0, 32], sizes = [8, 32], strides = [1, 1]} : vector<8x128xf32> to vector<8x32xf32>
    %52 = vector.extract_strided_slice %49 {offsets = [0, 64], sizes = [8, 32], strides = [1, 1]} : vector<8x128xf32> to vector<8x32xf32>
    %53 = vector.extract_strided_slice %48 {offsets = [0, 96], sizes = [8, 32], strides = [1, 1]} : vector<8x128xf32> to vector<8x32xf32>
    %54 = arith.mulf %51, %12 : vector<8x32xf32>
    %55 = arith.mulf %50, %52 : vector<8x32xf32>
    %56 = arith.addf %54, %55 : vector<8x32xf32>
    %57 = math.tanh %56 : vector<8x32xf32>
    %58 = arith.mulf %53, %57 : vector<8x32xf32>
    %59 = vector.extract_strided_slice %6 {offsets = [0, 1], sizes = [8, 1], strides = [1, 1]} : vector<8x8xf32> to vector<8x1xf32>
    %60 = vector.broadcast %59 : vector<8x1xf32> to vector<8x128xf32>
    %61 = vector.broadcast %7 : vector<1x128xf32> to vector<8x128xf32>
    %62 = arith.mulf %60, %61 : vector<8x128xf32>
    %63 = vector.broadcast %8 : vector<1x128xf32> to vector<8x128xf32>
    %64 = arith.addf %62, %63 : vector<8x128xf32>
    %65 = arith.truncf %36 : vector<8x32xf32> to vector<8x32xbf16>
    %cst_25 = arith.constant dense<0.000000e+00> : vector<8x128xf32>
    %66 = tpu.matmul %65, %0, %cst_25 {dimension_numbers = #tpu.dot_dimension_numbers<[1], [0], [0], [1], [0, 0, 1, 1], [], []>} : vector<8x32xbf16>, vector<32x128xbf16>, vector<8x128xf32> -> vector<8x128xf32>
    %67 = arith.addf %64, %66 : vector<8x128xf32>
    %68 = arith.negf %67 : vector<8x128xf32>
    %69 = math.exp %68 : vector<8x128xf32>
    %cst_26 = arith.constant 1.000000e+00 : f32
    %70 = vector.broadcast %cst_26 : f32 to vector<8x128xf32>
    %71 = arith.addf %70, %69 : vector<8x128xf32>
    %72 = arith.divf %70, %71 : vector<8x128xf32>
    %73 = math.tanh %67 : vector<8x128xf32>
    %74 = vector.extract_strided_slice %72 {offsets = [0, 0], sizes = [8, 32], strides = [1, 1]} : vector<8x128xf32> to vector<8x32xf32>
    %75 = vector.extract_strided_slice %72 {offsets = [0, 32], sizes = [8, 32], strides = [1, 1]} : vector<8x128xf32> to vector<8x32xf32>
    %76 = vector.extract_strided_slice %73 {offsets = [0, 64], sizes = [8, 32], strides = [1, 1]} : vector<8x128xf32> to vector<8x32xf32>
    %77 = vector.extract_strided_slice %72 {offsets = [0, 96], sizes = [8, 32], strides = [1, 1]} : vector<8x128xf32> to vector<8x32xf32>
    %78 = arith.mulf %75, %34 : vector<8x32xf32>
    %79 = arith.mulf %74, %76 : vector<8x32xf32>
    %80 = arith.addf %78, %79 : vector<8x32xf32>
    %81 = math.tanh %80 : vector<8x32xf32>
    %82 = arith.mulf %77, %81 : vector<8x32xf32>
    %83 = arith.truncf %82 : vector<8x32xf32> to vector<8x32xbf16>
    %cst_27 = arith.constant dense<0.000000e+00> : vector<8x128xf32>
    %84 = tpu.matmul %83, %2, %cst_27 {dimension_numbers = #tpu.dot_dimension_numbers<[1], [0], [0], [1], [0, 0, 1, 1], [], []>} : vector<8x32xbf16>, vector<32x128xbf16>, vector<8x128xf32> -> vector<8x128xf32>
    %85 = vector.broadcast %3 : vector<1x128xf32> to vector<8x128xf32>
    %86 = arith.addf %84, %85 : vector<8x128xf32>
    %87 = arith.truncf %58 : vector<8x32xf32> to vector<8x32xbf16>
    %cst_28 = arith.constant dense<0.000000e+00> : vector<8x128xf32>
    %88 = tpu.matmul %87, %1, %cst_28 {dimension_numbers = #tpu.dot_dimension_numbers<[1], [0], [0], [1], [0, 0, 1, 1], [], []>} : vector<8x32xbf16>, vector<32x128xbf16>, vector<8x128xf32> -> vector<8x128xf32>
    %89 = arith.addf %86, %88 : vector<8x128xf32>
    %90 = arith.negf %89 : vector<8x128xf32>
    %91 = math.exp %90 : vector<8x128xf32>
    %cst_29 = arith.constant 1.000000e+00 : f32
    %92 = vector.broadcast %cst_29 : f32 to vector<8x128xf32>
    %93 = arith.addf %92, %91 : vector<8x128xf32>
    %94 = arith.divf %92, %93 : vector<8x128xf32>
    %95 = math.tanh %89 : vector<8x128xf32>
    %96 = vector.extract_strided_slice %94 {offsets = [0, 0], sizes = [8, 32], strides = [1, 1]} : vector<8x128xf32> to vector<8x32xf32>
    %97 = vector.extract_strided_slice %94 {offsets = [0, 32], sizes = [8, 32], strides = [1, 1]} : vector<8x128xf32> to vector<8x32xf32>
    %98 = vector.extract_strided_slice %95 {offsets = [0, 64], sizes = [8, 32], strides = [1, 1]} : vector<8x128xf32> to vector<8x32xf32>
    %99 = vector.extract_strided_slice %94 {offsets = [0, 96], sizes = [8, 32], strides = [1, 1]} : vector<8x128xf32> to vector<8x32xf32>
    %100 = arith.mulf %97, %56 : vector<8x32xf32>
    %101 = arith.mulf %96, %98 : vector<8x32xf32>
    %102 = arith.addf %100, %101 : vector<8x32xf32>
    %103 = math.tanh %102 : vector<8x32xf32>
    %104 = arith.mulf %99, %103 : vector<8x32xf32>
    %105 = vector.extract_strided_slice %6 {offsets = [0, 2], sizes = [8, 1], strides = [1, 1]} : vector<8x8xf32> to vector<8x1xf32>
    %106 = vector.broadcast %105 : vector<8x1xf32> to vector<8x128xf32>
    %107 = vector.broadcast %7 : vector<1x128xf32> to vector<8x128xf32>
    %108 = arith.mulf %106, %107 : vector<8x128xf32>
    %109 = vector.broadcast %8 : vector<1x128xf32> to vector<8x128xf32>
    %110 = arith.addf %108, %109 : vector<8x128xf32>
    %111 = arith.truncf %82 : vector<8x32xf32> to vector<8x32xbf16>
    %cst_30 = arith.constant dense<0.000000e+00> : vector<8x128xf32>
    %112 = tpu.matmul %111, %0, %cst_30 {dimension_numbers = #tpu.dot_dimension_numbers<[1], [0], [0], [1], [0, 0, 1, 1], [], []>} : vector<8x32xbf16>, vector<32x128xbf16>, vector<8x128xf32> -> vector<8x128xf32>
    %113 = arith.addf %110, %112 : vector<8x128xf32>
    %114 = arith.negf %113 : vector<8x128xf32>
    %115 = math.exp %114 : vector<8x128xf32>
    %cst_31 = arith.constant 1.000000e+00 : f32
    %116 = vector.broadcast %cst_31 : f32 to vector<8x128xf32>
    %117 = arith.addf %116, %115 : vector<8x128xf32>
    %118 = arith.divf %116, %117 : vector<8x128xf32>
    %119 = math.tanh %113 : vector<8x128xf32>
    %120 = vector.extract_strided_slice %118 {offsets = [0, 0], sizes = [8, 32], strides = [1, 1]} : vector<8x128xf32> to vector<8x32xf32>
    %121 = vector.extract_strided_slice %118 {offsets = [0, 32], sizes = [8, 32], strides = [1, 1]} : vector<8x128xf32> to vector<8x32xf32>
    %122 = vector.extract_strided_slice %119 {offsets = [0, 64], sizes = [8, 32], strides = [1, 1]} : vector<8x128xf32> to vector<8x32xf32>
    %123 = vector.extract_strided_slice %118 {offsets = [0, 96], sizes = [8, 32], strides = [1, 1]} : vector<8x128xf32> to vector<8x32xf32>
    %124 = arith.mulf %121, %80 : vector<8x32xf32>
    %125 = arith.mulf %120, %122 : vector<8x32xf32>
    %126 = arith.addf %124, %125 : vector<8x32xf32>
    %127 = math.tanh %126 : vector<8x32xf32>
    %128 = arith.mulf %123, %127 : vector<8x32xf32>
    %129 = arith.truncf %128 : vector<8x32xf32> to vector<8x32xbf16>
    %cst_32 = arith.constant dense<0.000000e+00> : vector<8x128xf32>
    %130 = tpu.matmul %129, %2, %cst_32 {dimension_numbers = #tpu.dot_dimension_numbers<[1], [0], [0], [1], [0, 0, 1, 1], [], []>} : vector<8x32xbf16>, vector<32x128xbf16>, vector<8x128xf32> -> vector<8x128xf32>
    %131 = vector.broadcast %3 : vector<1x128xf32> to vector<8x128xf32>
    %132 = arith.addf %130, %131 : vector<8x128xf32>
    %133 = arith.truncf %104 : vector<8x32xf32> to vector<8x32xbf16>
    %cst_33 = arith.constant dense<0.000000e+00> : vector<8x128xf32>
    %134 = tpu.matmul %133, %1, %cst_33 {dimension_numbers = #tpu.dot_dimension_numbers<[1], [0], [0], [1], [0, 0, 1, 1], [], []>} : vector<8x32xbf16>, vector<32x128xbf16>, vector<8x128xf32> -> vector<8x128xf32>
    %135 = arith.addf %132, %134 : vector<8x128xf32>
    %136 = arith.negf %135 : vector<8x128xf32>
    %137 = math.exp %136 : vector<8x128xf32>
    %cst_34 = arith.constant 1.000000e+00 : f32
    %138 = vector.broadcast %cst_34 : f32 to vector<8x128xf32>
    %139 = arith.addf %138, %137 : vector<8x128xf32>
    %140 = arith.divf %138, %139 : vector<8x128xf32>
    %141 = math.tanh %135 : vector<8x128xf32>
    %142 = vector.extract_strided_slice %140 {offsets = [0, 0], sizes = [8, 32], strides = [1, 1]} : vector<8x128xf32> to vector<8x32xf32>
    %143 = vector.extract_strided_slice %140 {offsets = [0, 32], sizes = [8, 32], strides = [1, 1]} : vector<8x128xf32> to vector<8x32xf32>
    %144 = vector.extract_strided_slice %141 {offsets = [0, 64], sizes = [8, 32], strides = [1, 1]} : vector<8x128xf32> to vector<8x32xf32>
    %145 = vector.extract_strided_slice %140 {offsets = [0, 96], sizes = [8, 32], strides = [1, 1]} : vector<8x128xf32> to vector<8x32xf32>
    %146 = arith.mulf %143, %102 : vector<8x32xf32>
    %147 = arith.mulf %142, %144 : vector<8x32xf32>
    %148 = arith.addf %146, %147 : vector<8x32xf32>
    %149 = math.tanh %148 : vector<8x32xf32>
    %150 = arith.mulf %145, %149 : vector<8x32xf32>
    %151 = vector.extract_strided_slice %6 {offsets = [0, 3], sizes = [8, 1], strides = [1, 1]} : vector<8x8xf32> to vector<8x1xf32>
    %152 = vector.broadcast %151 : vector<8x1xf32> to vector<8x128xf32>
    %153 = vector.broadcast %7 : vector<1x128xf32> to vector<8x128xf32>
    %154 = arith.mulf %152, %153 : vector<8x128xf32>
    %155 = vector.broadcast %8 : vector<1x128xf32> to vector<8x128xf32>
    %156 = arith.addf %154, %155 : vector<8x128xf32>
    %157 = arith.truncf %128 : vector<8x32xf32> to vector<8x32xbf16>
    %cst_35 = arith.constant dense<0.000000e+00> : vector<8x128xf32>
    %158 = tpu.matmul %157, %0, %cst_35 {dimension_numbers = #tpu.dot_dimension_numbers<[1], [0], [0], [1], [0, 0, 1, 1], [], []>} : vector<8x32xbf16>, vector<32x128xbf16>, vector<8x128xf32> -> vector<8x128xf32>
    %159 = arith.addf %156, %158 : vector<8x128xf32>
    %160 = arith.negf %159 : vector<8x128xf32>
    %161 = math.exp %160 : vector<8x128xf32>
    %cst_36 = arith.constant 1.000000e+00 : f32
    %162 = vector.broadcast %cst_36 : f32 to vector<8x128xf32>
    %163 = arith.addf %162, %161 : vector<8x128xf32>
    %164 = arith.divf %162, %163 : vector<8x128xf32>
    %165 = math.tanh %159 : vector<8x128xf32>
    %166 = vector.extract_strided_slice %164 {offsets = [0, 0], sizes = [8, 32], strides = [1, 1]} : vector<8x128xf32> to vector<8x32xf32>
    %167 = vector.extract_strided_slice %164 {offsets = [0, 32], sizes = [8, 32], strides = [1, 1]} : vector<8x128xf32> to vector<8x32xf32>
    %168 = vector.extract_strided_slice %165 {offsets = [0, 64], sizes = [8, 32], strides = [1, 1]} : vector<8x128xf32> to vector<8x32xf32>
    %169 = vector.extract_strided_slice %164 {offsets = [0, 96], sizes = [8, 32], strides = [1, 1]} : vector<8x128xf32> to vector<8x32xf32>
    %170 = arith.mulf %167, %126 : vector<8x32xf32>
    %171 = arith.mulf %166, %168 : vector<8x32xf32>
    %172 = arith.addf %170, %171 : vector<8x32xf32>
    %173 = math.tanh %172 : vector<8x32xf32>
    %174 = arith.mulf %169, %173 : vector<8x32xf32>
    %175 = arith.truncf %174 : vector<8x32xf32> to vector<8x32xbf16>
    %cst_37 = arith.constant dense<0.000000e+00> : vector<8x128xf32>
    %176 = tpu.matmul %175, %2, %cst_37 {dimension_numbers = #tpu.dot_dimension_numbers<[1], [0], [0], [1], [0, 0, 1, 1], [], []>} : vector<8x32xbf16>, vector<32x128xbf16>, vector<8x128xf32> -> vector<8x128xf32>
    %177 = vector.broadcast %3 : vector<1x128xf32> to vector<8x128xf32>
    %178 = arith.addf %176, %177 : vector<8x128xf32>
    %179 = arith.truncf %150 : vector<8x32xf32> to vector<8x32xbf16>
    %cst_38 = arith.constant dense<0.000000e+00> : vector<8x128xf32>
    %180 = tpu.matmul %179, %1, %cst_38 {dimension_numbers = #tpu.dot_dimension_numbers<[1], [0], [0], [1], [0, 0, 1, 1], [], []>} : vector<8x32xbf16>, vector<32x128xbf16>, vector<8x128xf32> -> vector<8x128xf32>
    %181 = arith.addf %178, %180 : vector<8x128xf32>
    %182 = arith.negf %181 : vector<8x128xf32>
    %183 = math.exp %182 : vector<8x128xf32>
    %cst_39 = arith.constant 1.000000e+00 : f32
    %184 = vector.broadcast %cst_39 : f32 to vector<8x128xf32>
    %185 = arith.addf %184, %183 : vector<8x128xf32>
    %186 = arith.divf %184, %185 : vector<8x128xf32>
    %187 = math.tanh %181 : vector<8x128xf32>
    %188 = vector.extract_strided_slice %186 {offsets = [0, 0], sizes = [8, 32], strides = [1, 1]} : vector<8x128xf32> to vector<8x32xf32>
    %189 = vector.extract_strided_slice %186 {offsets = [0, 32], sizes = [8, 32], strides = [1, 1]} : vector<8x128xf32> to vector<8x32xf32>
    %190 = vector.extract_strided_slice %187 {offsets = [0, 64], sizes = [8, 32], strides = [1, 1]} : vector<8x128xf32> to vector<8x32xf32>
    %191 = vector.extract_strided_slice %186 {offsets = [0, 96], sizes = [8, 32], strides = [1, 1]} : vector<8x128xf32> to vector<8x32xf32>
    %192 = arith.mulf %189, %148 : vector<8x32xf32>
    %193 = arith.mulf %188, %190 : vector<8x32xf32>
    %194 = arith.addf %192, %193 : vector<8x32xf32>
    %195 = math.tanh %194 : vector<8x32xf32>
    %196 = arith.mulf %191, %195 : vector<8x32xf32>
    %197 = vector.extract_strided_slice %6 {offsets = [0, 4], sizes = [8, 1], strides = [1, 1]} : vector<8x8xf32> to vector<8x1xf32>
    %198 = vector.broadcast %197 : vector<8x1xf32> to vector<8x128xf32>
    %199 = vector.broadcast %7 : vector<1x128xf32> to vector<8x128xf32>
    %200 = arith.mulf %198, %199 : vector<8x128xf32>
    %201 = vector.broadcast %8 : vector<1x128xf32> to vector<8x128xf32>
    %202 = arith.addf %200, %201 : vector<8x128xf32>
    %203 = arith.truncf %174 : vector<8x32xf32> to vector<8x32xbf16>
    %cst_40 = arith.constant dense<0.000000e+00> : vector<8x128xf32>
    %204 = tpu.matmul %203, %0, %cst_40 {dimension_numbers = #tpu.dot_dimension_numbers<[1], [0], [0], [1], [0, 0, 1, 1], [], []>} : vector<8x32xbf16>, vector<32x128xbf16>, vector<8x128xf32> -> vector<8x128xf32>
    %205 = arith.addf %202, %204 : vector<8x128xf32>
    %206 = arith.negf %205 : vector<8x128xf32>
    %207 = math.exp %206 : vector<8x128xf32>
    %cst_41 = arith.constant 1.000000e+00 : f32
    %208 = vector.broadcast %cst_41 : f32 to vector<8x128xf32>
    %209 = arith.addf %208, %207 : vector<8x128xf32>
    %210 = arith.divf %208, %209 : vector<8x128xf32>
    %211 = math.tanh %205 : vector<8x128xf32>
    %212 = vector.extract_strided_slice %210 {offsets = [0, 0], sizes = [8, 32], strides = [1, 1]} : vector<8x128xf32> to vector<8x32xf32>
    %213 = vector.extract_strided_slice %210 {offsets = [0, 32], sizes = [8, 32], strides = [1, 1]} : vector<8x128xf32> to vector<8x32xf32>
    %214 = vector.extract_strided_slice %211 {offsets = [0, 64], sizes = [8, 32], strides = [1, 1]} : vector<8x128xf32> to vector<8x32xf32>
    %215 = vector.extract_strided_slice %210 {offsets = [0, 96], sizes = [8, 32], strides = [1, 1]} : vector<8x128xf32> to vector<8x32xf32>
    %216 = arith.mulf %213, %172 : vector<8x32xf32>
    %217 = arith.mulf %212, %214 : vector<8x32xf32>
    %218 = arith.addf %216, %217 : vector<8x32xf32>
    %219 = math.tanh %218 : vector<8x32xf32>
    %220 = arith.mulf %215, %219 : vector<8x32xf32>
    %221 = arith.truncf %220 : vector<8x32xf32> to vector<8x32xbf16>
    %cst_42 = arith.constant dense<0.000000e+00> : vector<8x128xf32>
    %222 = tpu.matmul %221, %2, %cst_42 {dimension_numbers = #tpu.dot_dimension_numbers<[1], [0], [0], [1], [0, 0, 1, 1], [], []>} : vector<8x32xbf16>, vector<32x128xbf16>, vector<8x128xf32> -> vector<8x128xf32>
    %223 = vector.broadcast %3 : vector<1x128xf32> to vector<8x128xf32>
    %224 = arith.addf %222, %223 : vector<8x128xf32>
    %225 = arith.truncf %196 : vector<8x32xf32> to vector<8x32xbf16>
    %cst_43 = arith.constant dense<0.000000e+00> : vector<8x128xf32>
    %226 = tpu.matmul %225, %1, %cst_43 {dimension_numbers = #tpu.dot_dimension_numbers<[1], [0], [0], [1], [0, 0, 1, 1], [], []>} : vector<8x32xbf16>, vector<32x128xbf16>, vector<8x128xf32> -> vector<8x128xf32>
    %227 = arith.addf %224, %226 : vector<8x128xf32>
    %228 = arith.negf %227 : vector<8x128xf32>
    %229 = math.exp %228 : vector<8x128xf32>
    %cst_44 = arith.constant 1.000000e+00 : f32
    %230 = vector.broadcast %cst_44 : f32 to vector<8x128xf32>
    %231 = arith.addf %230, %229 : vector<8x128xf32>
    %232 = arith.divf %230, %231 : vector<8x128xf32>
    %233 = math.tanh %227 : vector<8x128xf32>
    %234 = vector.extract_strided_slice %232 {offsets = [0, 0], sizes = [8, 32], strides = [1, 1]} : vector<8x128xf32> to vector<8x32xf32>
    %235 = vector.extract_strided_slice %232 {offsets = [0, 32], sizes = [8, 32], strides = [1, 1]} : vector<8x128xf32> to vector<8x32xf32>
    %236 = vector.extract_strided_slice %233 {offsets = [0, 64], sizes = [8, 32], strides = [1, 1]} : vector<8x128xf32> to vector<8x32xf32>
    %237 = vector.extract_strided_slice %232 {offsets = [0, 96], sizes = [8, 32], strides = [1, 1]} : vector<8x128xf32> to vector<8x32xf32>
    %238 = arith.mulf %235, %194 : vector<8x32xf32>
    %239 = arith.mulf %234, %236 : vector<8x32xf32>
    %240 = arith.addf %238, %239 : vector<8x32xf32>
    %241 = math.tanh %240 : vector<8x32xf32>
    %242 = arith.mulf %237, %241 : vector<8x32xf32>
    %243 = vector.extract_strided_slice %6 {offsets = [0, 5], sizes = [8, 1], strides = [1, 1]} : vector<8x8xf32> to vector<8x1xf32>
    %244 = vector.broadcast %243 : vector<8x1xf32> to vector<8x128xf32>
    %245 = vector.broadcast %7 : vector<1x128xf32> to vector<8x128xf32>
    %246 = arith.mulf %244, %245 : vector<8x128xf32>
    %247 = vector.broadcast %8 : vector<1x128xf32> to vector<8x128xf32>
    %248 = arith.addf %246, %247 : vector<8x128xf32>
    %249 = arith.truncf %220 : vector<8x32xf32> to vector<8x32xbf16>
    %cst_45 = arith.constant dense<0.000000e+00> : vector<8x128xf32>
    %250 = tpu.matmul %249, %0, %cst_45 {dimension_numbers = #tpu.dot_dimension_numbers<[1], [0], [0], [1], [0, 0, 1, 1], [], []>} : vector<8x32xbf16>, vector<32x128xbf16>, vector<8x128xf32> -> vector<8x128xf32>
    %251 = arith.addf %248, %250 : vector<8x128xf32>
    %252 = arith.negf %251 : vector<8x128xf32>
    %253 = math.exp %252 : vector<8x128xf32>
    %cst_46 = arith.constant 1.000000e+00 : f32
    %254 = vector.broadcast %cst_46 : f32 to vector<8x128xf32>
    %255 = arith.addf %254, %253 : vector<8x128xf32>
    %256 = arith.divf %254, %255 : vector<8x128xf32>
    %257 = math.tanh %251 : vector<8x128xf32>
    %258 = vector.extract_strided_slice %256 {offsets = [0, 0], sizes = [8, 32], strides = [1, 1]} : vector<8x128xf32> to vector<8x32xf32>
    %259 = vector.extract_strided_slice %256 {offsets = [0, 32], sizes = [8, 32], strides = [1, 1]} : vector<8x128xf32> to vector<8x32xf32>
    %260 = vector.extract_strided_slice %257 {offsets = [0, 64], sizes = [8, 32], strides = [1, 1]} : vector<8x128xf32> to vector<8x32xf32>
    %261 = vector.extract_strided_slice %256 {offsets = [0, 96], sizes = [8, 32], strides = [1, 1]} : vector<8x128xf32> to vector<8x32xf32>
    %262 = arith.mulf %259, %218 : vector<8x32xf32>
    %263 = arith.mulf %258, %260 : vector<8x32xf32>
    %264 = arith.addf %262, %263 : vector<8x32xf32>
    %265 = math.tanh %264 : vector<8x32xf32>
    %266 = arith.mulf %261, %265 : vector<8x32xf32>
    %267 = arith.truncf %266 : vector<8x32xf32> to vector<8x32xbf16>
    %cst_47 = arith.constant dense<0.000000e+00> : vector<8x128xf32>
    %268 = tpu.matmul %267, %2, %cst_47 {dimension_numbers = #tpu.dot_dimension_numbers<[1], [0], [0], [1], [0, 0, 1, 1], [], []>} : vector<8x32xbf16>, vector<32x128xbf16>, vector<8x128xf32> -> vector<8x128xf32>
    %269 = vector.broadcast %3 : vector<1x128xf32> to vector<8x128xf32>
    %270 = arith.addf %268, %269 : vector<8x128xf32>
    %271 = arith.truncf %242 : vector<8x32xf32> to vector<8x32xbf16>
    %cst_48 = arith.constant dense<0.000000e+00> : vector<8x128xf32>
    %272 = tpu.matmul %271, %1, %cst_48 {dimension_numbers = #tpu.dot_dimension_numbers<[1], [0], [0], [1], [0, 0, 1, 1], [], []>} : vector<8x32xbf16>, vector<32x128xbf16>, vector<8x128xf32> -> vector<8x128xf32>
    %273 = arith.addf %270, %272 : vector<8x128xf32>
    %274 = arith.negf %273 : vector<8x128xf32>
    %275 = math.exp %274 : vector<8x128xf32>
    %cst_49 = arith.constant 1.000000e+00 : f32
    %276 = vector.broadcast %cst_49 : f32 to vector<8x128xf32>
    %277 = arith.addf %276, %275 : vector<8x128xf32>
    %278 = arith.divf %276, %277 : vector<8x128xf32>
    %279 = math.tanh %273 : vector<8x128xf32>
    %280 = vector.extract_strided_slice %278 {offsets = [0, 0], sizes = [8, 32], strides = [1, 1]} : vector<8x128xf32> to vector<8x32xf32>
    %281 = vector.extract_strided_slice %278 {offsets = [0, 32], sizes = [8, 32], strides = [1, 1]} : vector<8x128xf32> to vector<8x32xf32>
    %282 = vector.extract_strided_slice %279 {offsets = [0, 64], sizes = [8, 32], strides = [1, 1]} : vector<8x128xf32> to vector<8x32xf32>
    %283 = vector.extract_strided_slice %278 {offsets = [0, 96], sizes = [8, 32], strides = [1, 1]} : vector<8x128xf32> to vector<8x32xf32>
    %284 = arith.mulf %281, %240 : vector<8x32xf32>
    %285 = arith.mulf %280, %282 : vector<8x32xf32>
    %286 = arith.addf %284, %285 : vector<8x32xf32>
    %287 = math.tanh %286 : vector<8x32xf32>
    %288 = arith.mulf %283, %287 : vector<8x32xf32>
    %289 = vector.extract_strided_slice %6 {offsets = [0, 6], sizes = [8, 1], strides = [1, 1]} : vector<8x8xf32> to vector<8x1xf32>
    %290 = vector.broadcast %289 : vector<8x1xf32> to vector<8x128xf32>
    %291 = vector.broadcast %7 : vector<1x128xf32> to vector<8x128xf32>
    %292 = arith.mulf %290, %291 : vector<8x128xf32>
    %293 = vector.broadcast %8 : vector<1x128xf32> to vector<8x128xf32>
    %294 = arith.addf %292, %293 : vector<8x128xf32>
    %295 = arith.truncf %266 : vector<8x32xf32> to vector<8x32xbf16>
    %cst_50 = arith.constant dense<0.000000e+00> : vector<8x128xf32>
    %296 = tpu.matmul %295, %0, %cst_50 {dimension_numbers = #tpu.dot_dimension_numbers<[1], [0], [0], [1], [0, 0, 1, 1], [], []>} : vector<8x32xbf16>, vector<32x128xbf16>, vector<8x128xf32> -> vector<8x128xf32>
    %297 = arith.addf %294, %296 : vector<8x128xf32>
    %298 = arith.negf %297 : vector<8x128xf32>
    %299 = math.exp %298 : vector<8x128xf32>
    %cst_51 = arith.constant 1.000000e+00 : f32
    %300 = vector.broadcast %cst_51 : f32 to vector<8x128xf32>
    %301 = arith.addf %300, %299 : vector<8x128xf32>
    %302 = arith.divf %300, %301 : vector<8x128xf32>
    %303 = math.tanh %297 : vector<8x128xf32>
    %304 = vector.extract_strided_slice %302 {offsets = [0, 0], sizes = [8, 32], strides = [1, 1]} : vector<8x128xf32> to vector<8x32xf32>
    %305 = vector.extract_strided_slice %302 {offsets = [0, 32], sizes = [8, 32], strides = [1, 1]} : vector<8x128xf32> to vector<8x32xf32>
    %306 = vector.extract_strided_slice %303 {offsets = [0, 64], sizes = [8, 32], strides = [1, 1]} : vector<8x128xf32> to vector<8x32xf32>
    %307 = vector.extract_strided_slice %302 {offsets = [0, 96], sizes = [8, 32], strides = [1, 1]} : vector<8x128xf32> to vector<8x32xf32>
    %308 = arith.mulf %305, %264 : vector<8x32xf32>
    %309 = arith.mulf %304, %306 : vector<8x32xf32>
    %310 = arith.addf %308, %309 : vector<8x32xf32>
    %311 = math.tanh %310 : vector<8x32xf32>
    %312 = arith.mulf %307, %311 : vector<8x32xf32>
    %313 = arith.truncf %312 : vector<8x32xf32> to vector<8x32xbf16>
    %cst_52 = arith.constant dense<0.000000e+00> : vector<8x128xf32>
    %314 = tpu.matmul %313, %2, %cst_52 {dimension_numbers = #tpu.dot_dimension_numbers<[1], [0], [0], [1], [0, 0, 1, 1], [], []>} : vector<8x32xbf16>, vector<32x128xbf16>, vector<8x128xf32> -> vector<8x128xf32>
    %315 = vector.broadcast %3 : vector<1x128xf32> to vector<8x128xf32>
    %316 = arith.addf %314, %315 : vector<8x128xf32>
    %317 = arith.truncf %288 : vector<8x32xf32> to vector<8x32xbf16>
    %cst_53 = arith.constant dense<0.000000e+00> : vector<8x128xf32>
    %318 = tpu.matmul %317, %1, %cst_53 {dimension_numbers = #tpu.dot_dimension_numbers<[1], [0], [0], [1], [0, 0, 1, 1], [], []>} : vector<8x32xbf16>, vector<32x128xbf16>, vector<8x128xf32> -> vector<8x128xf32>
    %319 = arith.addf %316, %318 : vector<8x128xf32>
    %320 = arith.negf %319 : vector<8x128xf32>
    %321 = math.exp %320 : vector<8x128xf32>
    %cst_54 = arith.constant 1.000000e+00 : f32
    %322 = vector.broadcast %cst_54 : f32 to vector<8x128xf32>
    %323 = arith.addf %322, %321 : vector<8x128xf32>
    %324 = arith.divf %322, %323 : vector<8x128xf32>
    %325 = math.tanh %319 : vector<8x128xf32>
    %326 = vector.extract_strided_slice %324 {offsets = [0, 0], sizes = [8, 32], strides = [1, 1]} : vector<8x128xf32> to vector<8x32xf32>
    %327 = vector.extract_strided_slice %324 {offsets = [0, 32], sizes = [8, 32], strides = [1, 1]} : vector<8x128xf32> to vector<8x32xf32>
    %328 = vector.extract_strided_slice %325 {offsets = [0, 64], sizes = [8, 32], strides = [1, 1]} : vector<8x128xf32> to vector<8x32xf32>
    %329 = vector.extract_strided_slice %324 {offsets = [0, 96], sizes = [8, 32], strides = [1, 1]} : vector<8x128xf32> to vector<8x32xf32>
    %330 = arith.mulf %327, %286 : vector<8x32xf32>
    %331 = arith.mulf %326, %328 : vector<8x32xf32>
    %332 = arith.addf %330, %331 : vector<8x32xf32>
    %333 = math.tanh %332 : vector<8x32xf32>
    %334 = arith.mulf %329, %333 : vector<8x32xf32>
    %335 = vector.extract_strided_slice %6 {offsets = [0, 7], sizes = [8, 1], strides = [1, 1]} : vector<8x8xf32> to vector<8x1xf32>
    %336 = vector.broadcast %335 : vector<8x1xf32> to vector<8x128xf32>
    %337 = vector.broadcast %7 : vector<1x128xf32> to vector<8x128xf32>
    %338 = arith.mulf %336, %337 : vector<8x128xf32>
    %339 = vector.broadcast %8 : vector<1x128xf32> to vector<8x128xf32>
    %340 = arith.addf %338, %339 : vector<8x128xf32>
    %341 = arith.truncf %312 : vector<8x32xf32> to vector<8x32xbf16>
    %cst_55 = arith.constant dense<0.000000e+00> : vector<8x128xf32>
    %342 = tpu.matmul %341, %0, %cst_55 {dimension_numbers = #tpu.dot_dimension_numbers<[1], [0], [0], [1], [0, 0, 1, 1], [], []>} : vector<8x32xbf16>, vector<32x128xbf16>, vector<8x128xf32> -> vector<8x128xf32>
    %343 = arith.addf %340, %342 : vector<8x128xf32>
    %344 = arith.negf %343 : vector<8x128xf32>
    %345 = math.exp %344 : vector<8x128xf32>
    %cst_56 = arith.constant 1.000000e+00 : f32
    %346 = vector.broadcast %cst_56 : f32 to vector<8x128xf32>
    %347 = arith.addf %346, %345 : vector<8x128xf32>
    %348 = arith.divf %346, %347 : vector<8x128xf32>
    %349 = math.tanh %343 : vector<8x128xf32>
    %350 = vector.extract_strided_slice %348 {offsets = [0, 0], sizes = [8, 32], strides = [1, 1]} : vector<8x128xf32> to vector<8x32xf32>
    %351 = vector.extract_strided_slice %348 {offsets = [0, 32], sizes = [8, 32], strides = [1, 1]} : vector<8x128xf32> to vector<8x32xf32>
    %352 = vector.extract_strided_slice %349 {offsets = [0, 64], sizes = [8, 32], strides = [1, 1]} : vector<8x128xf32> to vector<8x32xf32>
    %353 = vector.extract_strided_slice %348 {offsets = [0, 96], sizes = [8, 32], strides = [1, 1]} : vector<8x128xf32> to vector<8x32xf32>
    %354 = arith.mulf %351, %310 : vector<8x32xf32>
    %355 = arith.mulf %350, %352 : vector<8x32xf32>
    %356 = arith.addf %354, %355 : vector<8x32xf32>
    %357 = math.tanh %356 : vector<8x32xf32>
    %358 = arith.mulf %353, %357 : vector<8x32xf32>
    %359 = arith.truncf %358 : vector<8x32xf32> to vector<8x32xbf16>
    %cst_57 = arith.constant dense<0.000000e+00> : vector<8x128xf32>
    %360 = tpu.matmul %359, %2, %cst_57 {dimension_numbers = #tpu.dot_dimension_numbers<[1], [0], [0], [1], [0, 0, 1, 1], [], []>} : vector<8x32xbf16>, vector<32x128xbf16>, vector<8x128xf32> -> vector<8x128xf32>
    %361 = vector.broadcast %3 : vector<1x128xf32> to vector<8x128xf32>
    %362 = arith.addf %360, %361 : vector<8x128xf32>
    %363 = arith.truncf %334 : vector<8x32xf32> to vector<8x32xbf16>
    %cst_58 = arith.constant dense<0.000000e+00> : vector<8x128xf32>
    %364 = tpu.matmul %363, %1, %cst_58 {dimension_numbers = #tpu.dot_dimension_numbers<[1], [0], [0], [1], [0, 0, 1, 1], [], []>} : vector<8x32xbf16>, vector<32x128xbf16>, vector<8x128xf32> -> vector<8x128xf32>
    %365 = arith.addf %362, %364 : vector<8x128xf32>
    %366 = arith.negf %365 : vector<8x128xf32>
    %367 = math.exp %366 : vector<8x128xf32>
    %cst_59 = arith.constant 1.000000e+00 : f32
    %368 = vector.broadcast %cst_59 : f32 to vector<8x128xf32>
    %369 = arith.addf %368, %367 : vector<8x128xf32>
    %370 = arith.divf %368, %369 : vector<8x128xf32>
    %371 = math.tanh %365 : vector<8x128xf32>
    %372 = vector.extract_strided_slice %370 {offsets = [0, 0], sizes = [8, 32], strides = [1, 1]} : vector<8x128xf32> to vector<8x32xf32>
    %373 = vector.extract_strided_slice %370 {offsets = [0, 32], sizes = [8, 32], strides = [1, 1]} : vector<8x128xf32> to vector<8x32xf32>
    %374 = vector.extract_strided_slice %371 {offsets = [0, 64], sizes = [8, 32], strides = [1, 1]} : vector<8x128xf32> to vector<8x32xf32>
    %375 = vector.extract_strided_slice %370 {offsets = [0, 96], sizes = [8, 32], strides = [1, 1]} : vector<8x128xf32> to vector<8x32xf32>
    %376 = arith.mulf %373, %332 : vector<8x32xf32>
    %377 = arith.mulf %372, %374 : vector<8x32xf32>
    %378 = arith.addf %376, %377 : vector<8x32xf32>
    %379 = math.tanh %378 : vector<8x32xf32>
    %380 = arith.mulf %375, %379 : vector<8x32xf32>
    %cst_60 = arith.constant dense<0.000000e+00> : vector<8x1xf32>
    %381 = tpu.matmul %380, %4, %cst_60 {dimension_numbers = #tpu.dot_dimension_numbers<[1], [0], [0], [1], [0, 0, 1, 1], [], []>} : vector<8x32xf32>, vector<32x1xf32>, vector<8x1xf32> -> vector<8x1xf32>
    %382 = vector.broadcast %5 : vector<1x1xf32> to vector<8x1xf32>
    %383 = arith.addf %381, %382 : vector<8x1xf32>
    %384 = vector.extract_strided_slice %383 {offsets = [0, 0], sizes = [2, 1], strides = [1, 1]} : vector<8x1xf32> to vector<2x1xf32>
    %c0_61 = arith.constant 0 : index
    %c0_62 = arith.constant 0 : index
    %385 = vector.load %arg9[%c0_61, %c0_62] : memref<2x1xf32, #tpu.memory_space<vmem>>, vector<2x1xf32>
    tpu.vector_store %arg9[%c0_61, %c0_62], %384 {strides = array<i32>} : memref<2x1xf32, #tpu.memory_space<vmem>>, vector<2x1xf32>,
    return
  }
}

</mosaic_0001>

<llo_original>
// kernel: rnn_forward.1
$region0: #{rnn_forward.1}
  #allocation0 [shape = 'u32[]', space=smem, size = 0x4, offset = 0x4, fixed_abs, tag = 'smem constant byte address 0x4 - core index']
  #allocation1 [shape = 'u32[144,128]{1,0:T(1,128)}', space=vmem, size = 0x12000, scoped, tag = 'internal scratch']
  #allocation2 [shape = 'f32[1,1]{1,0:T(1,128)S(1)}', space=vmem, size = 0x200, scoped, tag = 'scoped memory for rnn_forward.1']
  %s0 = inlined_call_operand.vmem [shape: f32[8,8], index: 0, kind: input, shape index: {}]
  %s1 = inlined_call_operand.vmem [shape: f32[1,128], index: 1, kind: input, shape index: {}]
  %s2 = inlined_call_operand.vmem [shape: f32[1,128], index: 2, kind: input, shape index: {}]
  %s3 = inlined_call_operand.vmem [shape: bf16[32,128], index: 3, kind: input, shape index: {}]
  %s4 = inlined_call_operand.vmem [shape: bf16[32,128], index: 4, kind: input, shape index: {}]
  %s5 = inlined_call_operand.vmem [shape: bf16[32,128], index: 5, kind: input, shape index: {}]
  %s6 = inlined_call_operand.vmem [shape: f32[1,128], index: 6, kind: input, shape index: {}]
  %s7 = inlined_call_operand.vmem [shape: f32[32,1], index: 7, kind: input, shape index: {}]
  %s8 = inlined_call_operand.<no memory space> [shape: f32[1,1], index: 8, kind: input, shape index: {}]
  %s9 = inlined_call_operand.vmem [shape: f32[2,1], index: 9, kind: output, shape index: {}]
  %s10 = sld [smem:[#allocation0]]
  $region46: #{rnn_forward.1} parent=0
    _
  %s12 = ssub.s32 1, %s10
  %s13 = scalar_select 0, %s12, %s10
  %v14 = vstv %s8
  %15 = vst [vmem:[#allocation2] sm:$0x1] %v14
  // Predicated region
  $region2: #{rnn_forward.1} parent=0 // pred_check
    _
  $region3: #{rnn_forward.1} parent=0 // pred_check_branch
    %17 = sbr.rel (0) target = $region5
  $region4: #{rnn_forward.1} parent=0 // pred_region
    _
  $region5: #{rnn_forward.1} parent=0 // pred_fallthru
    _
  // Predicated region
  $region6: #{rnn_forward.1} parent=0 // pred_check
    _
  $region7: #{rnn_forward.1} parent=0 // pred_check_branch
    %19 = sbr.rel (0) target = $region9
  $region8: #{rnn_forward.1} parent=0 // pred_region
    _
  $region9: #{rnn_forward.1} parent=0 // pred_fallthru
    _
  // Predicated region
  $region10: #{rnn_forward.1} parent=0 // pred_check
    _
  $region11: #{rnn_forward.1} parent=0 // pred_check_branch
    %21 = sbr.rel (0) target = $region13
  $region12: #{rnn_forward.1} parent=0 // pred_region
    _
  $region13: #{rnn_forward.1} parent=0 // pred_fallthru
    _
  // Predicated region
  $region14: #{rnn_forward.1} parent=0 // pred_check
    _
  $region15: #{rnn_forward.1} parent=0 // pred_check_branch
    %23 = sbr.rel (0) target = $region17
  $region16: #{rnn_forward.1} parent=0 // pred_region
    _
  $region17: #{rnn_forward.1} parent=0 // pred_fallthru
    _
  // Predicated region
  $region18: #{rnn_forward.1} parent=0 // pred_check
    _
  $region19: #{rnn_forward.1} parent=0 // pred_check_branch
    %25 = sbr.rel (0) target = $region21
  $region20: #{rnn_forward.1} parent=0 // pred_region
    _
  $region21: #{rnn_forward.1} parent=0 // pred_fallthru
    _
  // Predicated region
  $region22: #{rnn_forward.1} parent=0 // pred_check
    _
  $region23: #{rnn_forward.1} parent=0 // pred_check_branch
    %27 = sbr.rel (0) target = $region25
  $region24: #{rnn_forward.1} parent=0 // pred_region
    _
  $region25: #{rnn_forward.1} parent=0 // pred_fallthru
    _
  // Predicated region
  $region26: #{rnn_forward.1} parent=0 // pred_check
    _
  $region27: #{rnn_forward.1} parent=0 // pred_check_branch
    %29 = sbr.rel (0) target = $region29
  $region28: #{rnn_forward.1} parent=0 // pred_region
    _
  $region29: #{rnn_forward.1} parent=0 // pred_fallthru
    _
  // Predicated region
  $region30: #{rnn_forward.1} parent=0 // pred_check
    _
  $region31: #{rnn_forward.1} parent=0 // pred_check_branch
    %31 = sbr.rel (0) target = $region33
  $region32: #{rnn_forward.1} parent=0 // pred_region
    _
  $region33: #{rnn_forward.1} parent=0 // pred_fallthru
    _
  // Predicated region
  $region34: #{rnn_forward.1} parent=0 // pred_check
    _
  $region35: #{rnn_forward.1} parent=0 // pred_check_branch
    %33 = sbr.rel (0) target = $region37
  $region36: #{rnn_forward.1} parent=0 // pred_region
    _
  $region37: #{rnn_forward.1} parent=0 // pred_fallthru
    _
  %v35 = vld [vmem:[%s3] sm:$0xf]
  %v36 = vld [vmem:[%s3 + $0x4] sm:$0xf]
  %v37 = vld [vmem:[%s3 + $0x8] sm:$0xf]
  %v38 = vld [vmem:[%s3 + $0xc] sm:$0xf]
  %v39 = vld [vmem:[%s4] sm:$0xf]
  %v40 = vld [vmem:[%s4 + $0x4] sm:$0xf]
  %v41 = vld [vmem:[%s4 + $0x8] sm:$0xf]
  %v42 = vld [vmem:[%s4 + $0xc] sm:$0xf]
  %v43 = vld [vmem:[%s5] sm:$0xf]
  %v44 = vld [vmem:[%s5 + $0x4] sm:$0xf]
  %v45 = vld [vmem:[%s5 + $0x8] sm:$0xf]
  %v46 = vld [vmem:[%s5 + $0xc] sm:$0xf]
  %v47 = vld [vmem:[%s6] sm:$0x1]
  %v48 = vld [vmem:[%s7] sm:$0xff]
  %v49 = vld [vmem:[%s7 + $0x8] sm:$0xff]
  %v50 = vld [vmem:[%s7 + $0x10] sm:$0xff]
  %v51 = vld [vmem:[%s7 + $0x18] sm:$0xff]
  %v52 = vld [vmem:[#allocation2] sm:$0x1]
  %v53 = vld [vmem:[%s0] sm:$0xff]
  %v54 = vld [vmem:[%s1] sm:$0x1]
  %v55 = vld [vmem:[%s2] sm:$0x1]
  %57 = vset.pattern.permute.xlu0 0
  %58 = vperm.xlu0 %57, %v53
  %v59 = vpop.permute.xlu0 %58
  %v62 = vlaneseq
  %v63 = vshrl.u32 %v62, 7
  %v64 = vsub.s32 0, %v63
  %v65 = vrot.slane %v54, %v64
  %v67 = vmul.f32 %v59, %v65
  %v69 = vlaneseq
  %v70 = vshrl.u32 %v69, 7
  %v71 = vsub.s32 0, %v70
  %v72 = vrot.slane %v55, %v71
  %v74 = vadd.f32 %v67, %v72
  %v79 = vunpack.c.l.b16 %v35
  %v80 = vunpack.c.l.b16 %v36
  %v81 = vunpack.c.l.b16 %v37
  %v82 = vunpack.c.l.b16 %v38
  %v83 = vpack.c.b16 %v80, %v79
  %v84 = vpack.c.b16 %v82, %v81
  %vm87 = vcmask 261120
  %v89 = vsel %vm87, 0, 0
  %91 = vmatprep.subr.bf16.mxu0 0
  %92 = vmatpush1.bf16.msra.mxu0 %v83
  %93 = vmatprep.subr.bf16.mxu0 0
  %94 = vmatpush1.bf16.msra.mxu0 %v84
  %95 = vmatprep.subr.bf16.mxu0 0
  %96 = vmatpush1.bf16.msra.mxu0 0
  %97 = vmatprep.subr.bf16.mxu0 0
  %98 = vmatpush1.bf16.msra.mxu0 0
  %99 = vmatprep.subr.bf16.mxu0 0
  %100 = vmatpush1.bf16.msra.mxu0 0
  %101 = vmatprep.subr.bf16.mxu0 0
  %102 = vmatpush1.bf16.msra.mxu0 0
  %103 = vmatprep.subr.bf16.mxu0 0
  %104 = vmatpush1.bf16.msra.mxu0 0
  %105 = vmatprep.subr.bf16.mxu0 0
  %106 = vmatpush1.bf16.msra.mxu0 0
  %107 = vmatprep.subr.bf16.mxu0 0
  %108 = vmatpush1.bf16.msra.mxu0 0
  %109 = vmatprep.subr.bf16.mxu0 0
  %110 = vmatpush1.bf16.msra.mxu0 0
  %111 = vmatprep.subr.bf16.mxu0 0
  %112 = vmatpush1.bf16.msra.mxu0 0
  %113 = vmatprep.subr.bf16.mxu0 0
  %114 = vmatpush1.bf16.msra.mxu0 0
  %115 = vmatprep.subr.bf16.mxu0 0
  %116 = vmatpush1.bf16.msra.mxu0 0
  %117 = vmatprep.subr.bf16.mxu0 0
  %118 = vmatpush1.bf16.msra.mxu0 0
  %119 = vmatprep.subr.bf16.mxu0 0
  %120 = vmatpush1.bf16.msra.mxu0 0
  %121 = vmatprep.subr.bf16.mxu0 0
  %122 = vmatpush1.bf16.msra.mxu0 0
  %123 = vmatprep.mubr.bf16.mxu0 0
  %124 = vmatmul.mubr.bf16.gmra.mrb[0].mxu0 %v89
  %v125 = vpop.f32.mrb[0].mxu0
  %v126 = vadd.f32 0.0, %v125
  %v127 = vpop.f32.mrb[0].mxu0
  %v128 = vpop.f32.mrb[0].mxu0
  %v129 = vpop.f32.mrb[0].mxu0
  %130 = vdwg.mxu0
  %v131 = vadd.f32 %v74, %v126
  %v132 = vxor.u32 %v131, 2147483648
  %v133 = vmul.f32 %v132, 1.442695
  %v134 = vpow.pop %v133
  %v135 = vadd.f32 %v134, 1.0
  %v136 = vrcp.pop %v135
  %v137 = vmul.f32 1.0, %v136
  %v138 = vtanh.pop %v131
  %v139 = vmul.f32 %v137, 0.0
  %141 = vrot.lane.b32.xlu0 %v138, 64
  %v142 = vpop.permute.xlu0 %141
  %v144 = vmul.f32 %v137, %v142
  %146 = vrot.lane.b32.xlu0 %v144, 32
  %v147 = vpop.permute.xlu0 %146
  %v149 = vadd.f32 %v139, %v147
  %v150 = vtanh.pop %v149
  %152 = vrot.lane.b32.xlu0 %v150, 64
  %v153 = vpop.permute.xlu0 %152
  %v155 = vmul.f32 %v137, %v153
  %v156 = vpack.c.bf16 %v155, %v155
  %v158 = vlaneseq
  %v159 = vshrl.u32 %v158, 7
  %v160 = vsub.s32 0, %v159
  %v161 = vrot.slane %v47, %v160
  %164 = vrot.lane.b32.xlu0 %v156, 32
  %v165 = vpop.permute.xlu0 %164
  %v170 = vunpack.c.l.b16 %v43
  %v171 = vunpack.c.l.b16 %v44
  %v172 = vunpack.c.l.b16 %v45
  %v173 = vunpack.c.l.b16 %v46
  %v174 = vpack.c.b16 %v171, %v170
  %v175 = vpack.c.b16 %v173, %v172
  %v179 = vsel %vm87, %v165, 0
  %181 = vmatprep.subr.bf16.mxu0 0
  %182 = vmatpush1.bf16.msra.mxu0 %v174
  %183 = vmatprep.subr.bf16.mxu0 0
  %184 = vmatpush1.bf16.msra.mxu0 %v175
  %185 = vmatprep.subr.bf16.mxu0 0
  %186 = vmatpush1.bf16.msra.mxu0 0
  %187 = vmatprep.subr.bf16.mxu0 0
  %188 = vmatpush1.bf16.msra.mxu0 0
  %189 = vmatprep.subr.bf16.mxu0 0
  %190 = vmatpush1.bf16.msra.mxu0 0
  %191 = vmatprep.subr.bf16.mxu0 0
  %192 = vmatpush1.bf16.msra.mxu0 0
  %193 = vmatprep.subr.bf16.mxu0 0
  %194 = vmatpush1.bf16.msra.mxu0 0
  %195 = vmatprep.subr.bf16.mxu0 0
  %196 = vmatpush1.bf16.msra.mxu0 0
  %197 = vmatprep.subr.bf16.mxu0 0
  %198 = vmatpush1.bf16.msra.mxu0 0
  %199 = vmatprep.subr.bf16.mxu0 0
  %200 = vmatpush1.bf16.msra.mxu0 0
  %201 = vmatprep.subr.bf16.mxu0 0
  %202 = vmatpush1.bf16.msra.mxu0 0
  %203 = vmatprep.subr.bf16.mxu0 0
  %204 = vmatpush1.bf16.msra.mxu0 0
  %205 = vmatprep.subr.bf16.mxu0 0
  %206 = vmatpush1.bf16.msra.mxu0 0
  %207 = vmatprep.subr.bf16.mxu0 0
  %208 = vmatpush1.bf16.msra.mxu0 0
  %209 = vmatprep.subr.bf16.mxu0 0
  %210 = vmatpush1.bf16.msra.mxu0 0
  %211 = vmatprep.subr.bf16.mxu0 0
  %212 = vmatpush1.bf16.msra.mxu0 0
  %213 = vmatprep.mubr.bf16.mxu0 0
  %214 = vmatmul.mubr.bf16.gmra.mrb[0].mxu0 %v179
  %v215 = vpop.f32.mrb[0].mxu0
  %v216 = vadd.f32 %v161, %v215
  %v217 = vpop.f32.mrb[0].mxu0
  %v218 = vpop.f32.mrb[0].mxu0
  %v219 = vpop.f32.mrb[0].mxu0
  %220 = vdwg.mxu0
  %v225 = vunpack.c.l.b16 %v39
  %v226 = vunpack.c.l.b16 %v40
  %v227 = vunpack.c.l.b16 %v41
  %v228 = vunpack.c.l.b16 %v42
  %v229 = vpack.c.b16 %v226, %v225
  %v230 = vpack.c.b16 %v228, %v227
  %233 = vmatprep.subr.bf16.mxu0 0
  %234 = vmatpush1.bf16.msra.mxu0 %v229
  %235 = vmatprep.subr.bf16.mxu0 0
  %236 = vmatpush1.bf16.msra.mxu0 %v230
  %237 = vmatprep.subr.bf16.mxu0 0
  %238 = vmatpush1.bf16.msra.mxu0 0
  %239 = vmatprep.subr.bf16.mxu0 0
  %240 = vmatpush1.bf16.msra.mxu0 0
  %241 = vmatprep.subr.bf16.mxu0 0
  %242 = vmatpush1.bf16.msra.mxu0 0
  %243 = vmatprep.subr.bf16.mxu0 0
  %244 = vmatpush1.bf16.msra.mxu0 0
  %245 = vmatprep.subr.bf16.mxu0 0
  %246 = vmatpush1.bf16.msra.mxu0 0
  %247 = vmatprep.subr.bf16.mxu0 0
  %248 = vmatpush1.bf16.msra.mxu0 0
  %249 = vmatprep.subr.bf16.mxu0 0
  %250 = vmatpush1.bf16.msra.mxu0 0
  %251 = vmatprep.subr.bf16.mxu0 0
  %252 = vmatpush1.bf16.msra.mxu0 0
  %253 = vmatprep.subr.bf16.mxu0 0
  %254 = vmatpush1.bf16.msra.mxu0 0
  %255 = vmatprep.subr.bf16.mxu0 0
  %256 = vmatpush1.bf16.msra.mxu0 0
  %257 = vmatprep.subr.bf16.mxu0 0
  %258 = vmatpush1.bf16.msra.mxu0 0
  %259 = vmatprep.subr.bf16.mxu0 0
  %260 = vmatpush1.bf16.msra.mxu0 0
  %261 = vmatprep.subr.bf16.mxu0 0
  %262 = vmatpush1.bf16.msra.mxu0 0
  %263 = vmatprep.subr.bf16.mxu0 0
  %264 = vmatpush1.bf16.msra.mxu0 0
  %265 = vmatprep.mubr.bf16.mxu0 0
  %266 = vmatmul.mubr.bf16.gmra.mrb[0].mxu0 %v89
  %v267 = vpop.f32.mrb[0].mxu0
  %v268 = vadd.f32 0.0, %v267
  %v269 = vpop.f32.mrb[0].mxu0
  %v270 = vpop.f32.mrb[0].mxu0
  %v271 = vpop.f32.mrb[0].mxu0
  %272 = vdwg.mxu0
  %v273 = vadd.f32 %v216, %v268
  %v274 = vxor.u32 %v273, 2147483648
  %v275 = vmul.f32 %v274, 1.442695
  %v276 = vpow.pop %v275
  %v277 = vadd.f32 %v276, 1.0
  %v278 = vrcp.pop %v277
  %v279 = vmul.f32 1.0, %v278
  %v280 = vtanh.pop %v273
  %v281 = vmul.f32 %v279, 0.0
  %283 = vrot.lane.b32.xlu0 %v280, 64
  %v284 = vpop.permute.xlu0 %283
  %v286 = vmul.f32 %v279, %v284
  %288 = vrot.lane.b32.xlu0 %v286, 32
  %v289 = vpop.permute.xlu0 %288
  %v291 = vadd.f32 %v281, %v289
  %v292 = vtanh.pop %v291
  %294 = vrot.lane.b32.xlu0 %v292, 64
  %v295 = vpop.permute.xlu0 %294
  %v297 = vmul.f32 %v279, %v295
  %298 = vset.pattern.permute.xlu0 1
  %299 = vperm.xlu0 %298, %v53
  %v300 = vpop.permute.xlu0 %299
  %v302 = vmul.f32 %v300, %v65
  %v303 = vadd.f32 %v302, %v72
  %304 = vmatprep.subr.bf16.mxu0 0
  %305 = vmatpush1.bf16.msra.mxu0 %v83
  %306 = vmatprep.subr.bf16.mxu0 0
  %307 = vmatpush1.bf16.msra.mxu0 %v84
  %308 = vmatprep.subr.bf16.mxu0 0
  %309 = vmatpush1.bf16.msra.mxu0 0
  %310 = vmatprep.subr.bf16.mxu0 0
  %311 = vmatpush1.bf16.msra.mxu0 0
  %312 = vmatprep.subr.bf16.mxu0 0
  %313 = vmatpush1.bf16.msra.mxu0 0
  %314 = vmatprep.subr.bf16.mxu0 0
  %315 = vmatpush1.bf16.msra.mxu0 0
  %316 = vmatprep.subr.bf16.mxu0 0
  %317 = vmatpush1.bf16.msra.mxu0 0
  %318 = vmatprep.subr.bf16.mxu0 0
  %319 = vmatpush1.bf16.msra.mxu0 0
  %320 = vmatprep.subr.bf16.mxu0 0
  %321 = vmatpush1.bf16.msra.mxu0 0
  %322 = vmatprep.subr.bf16.mxu0 0
  %323 = vmatpush1.bf16.msra.mxu0 0
  %324 = vmatprep.subr.bf16.mxu0 0
  %325 = vmatpush1.bf16.msra.mxu0 0
  %326 = vmatprep.subr.bf16.mxu0 0
  %327 = vmatpush1.bf16.msra.mxu0 0
  %328 = vmatprep.subr.bf16.mxu0 0
  %329 = vmatpush1.bf16.msra.mxu0 0
  %330 = vmatprep.subr.bf16.mxu0 0
  %331 = vmatpush1.bf16.msra.mxu0 0
  %332 = vmatprep.subr.bf16.mxu0 0
  %333 = vmatpush1.bf16.msra.mxu0 0
  %334 = vmatprep.subr.bf16.mxu0 0
  %335 = vmatpush1.bf16.msra.mxu0 0
  %336 = vmatprep.mubr.bf16.mxu0 0
  %337 = vmatmul.mubr.bf16.gmra.mrb[0].mxu0 %v179
  %v338 = vpop.f32.mrb[0].mxu0
  %v339 = vadd.f32 0.0, %v338
  %v340 = vpop.f32.mrb[0].mxu0
  %v341 = vpop.f32.mrb[0].mxu0
  %v342 = vpop.f32.mrb[0].mxu0
  %343 = vdwg.mxu0
  %v344 = vadd.f32 %v303, %v339
  %v345 = vxor.u32 %v344, 2147483648
  %v346 = vmul.f32 %v345, 1.442695
  %v347 = vpow.pop %v346
  %v348 = vadd.f32 %v347, 1.0
  %v349 = vrcp.pop %v348
  %v350 = vmul.f32 1.0, %v349
  %v351 = vtanh.pop %v344
  %v352 = vmul.f32 %v350, %v149
  %354 = vrot.lane.b32.xlu0 %v351, 64
  %v355 = vpop.permute.xlu0 %354
  %v357 = vmul.f32 %v350, %v355
  %359 = vrot.lane.b32.xlu0 %v357, 32
  %v360 = vpop.permute.xlu0 %359
  %v362 = vadd.f32 %v352, %v360
  %v363 = vtanh.pop %v362
  %365 = vrot.lane.b32.xlu0 %v363, 64
  %v366 = vpop.permute.xlu0 %365
  %v368 = vmul.f32 %v350, %v366
  %v369 = vpack.c.bf16 %v368, %v368
  %371 = vrot.lane.b32.xlu0 %v369, 32
  %v372 = vpop.permute.xlu0 %371
  %v374 = vsel %vm87, %v372, 0
  %376 = vmatprep.subr.bf16.mxu0 0
  %377 = vmatpush1.bf16.msra.mxu0 %v174
  %378 = vmatprep.subr.bf16.mxu0 0
  %379 = vmatpush1.bf16.msra.mxu0 %v175
  %380 = vmatprep.subr.bf16.mxu0 0
  %381 = vmatpush1.bf16.msra.mxu0 0
  %382 = vmatprep.subr.bf16.mxu0 0
  %383 = vmatpush1.bf16.msra.mxu0 0
  %384 = vmatprep.subr.bf16.mxu0 0
  %385 = vmatpush1.bf16.msra.mxu0 0
  %386 = vmatprep.subr.bf16.mxu0 0
  %387 = vmatpush1.bf16.msra.mxu0 0
  %388 = vmatprep.subr.bf16.mxu0 0
  %389 = vmatpush1.bf16.msra.mxu0 0
  %390 = vmatprep.subr.bf16.mxu0 0
  %391 = vmatpush1.bf16.msra.mxu0 0
  %392 = vmatprep.subr.bf16.mxu0 0
  %393 = vmatpush1.bf16.msra.mxu0 0
  %394 = vmatprep.subr.bf16.mxu0 0
  %395 = vmatpush1.bf16.msra.mxu0 0
  %396 = vmatprep.subr.bf16.mxu0 0
  %397 = vmatpush1.bf16.msra.mxu0 0
  %398 = vmatprep.subr.bf16.mxu0 0
  %399 = vmatpush1.bf16.msra.mxu0 0
  %400 = vmatprep.subr.bf16.mxu0 0
  %401 = vmatpush1.bf16.msra.mxu0 0
  %402 = vmatprep.subr.bf16.mxu0 0
  %403 = vmatpush1.bf16.msra.mxu0 0
  %404 = vmatprep.subr.bf16.mxu0 0
  %405 = vmatpush1.bf16.msra.mxu0 0
  %406 = vmatprep.subr.bf16.mxu0 0
  %407 = vmatpush1.bf16.msra.mxu0 0
  %408 = vmatprep.mubr.bf16.mxu0 0
  %409 = vmatmul.mubr.bf16.gmra.mrb[0].mxu0 %v374
  %v410 = vpop.f32.mrb[0].mxu0
  %v411 = vadd.f32 %v161, %v410
  %v412 = vpop.f32.mrb[0].mxu0
  %v413 = vpop.f32.mrb[0].mxu0
  %v414 = vpop.f32.mrb[0].mxu0
  %415 = vdwg.mxu0
  %v416 = vpack.c.bf16 %v297, %v297
  %418 = vrot.lane.b32.xlu0 %v416, 32
  %v419 = vpop.permute.xlu0 %418
  %v421 = vsel %vm87, %v419, 0
  %423 = vmatprep.subr.bf16.mxu0 0
  %424 = vmatpush1.bf16.msra.mxu0 %v229
  %425 = vmatprep.subr.bf16.mxu0 0
  %426 = vmatpush1.bf16.msra.mxu0 %v230
  %427 = vmatprep.subr.bf16.mxu0 0
  %428 = vmatpush1.bf16.msra.mxu0 0
  %429 = vmatprep.subr.bf16.mxu0 0
  %430 = vmatpush1.bf16.msra.mxu0 0
  %431 = vmatprep.subr.bf16.mxu0 0
  %432 = vmatpush1.bf16.msra.mxu0 0
  %433 = vmatprep.subr.bf16.mxu0 0
  %434 = vmatpush1.bf16.msra.mxu0 0
  %435 = vmatprep.subr.bf16.mxu0 0
  %436 = vmatpush1.bf16.msra.mxu0 0
  %437 = vmatprep.subr.bf16.mxu0 0
  %438 = vmatpush1.bf16.msra.mxu0 0
  %439 = vmatprep.subr.bf16.mxu0 0
  %440 = vmatpush1.bf16.msra.mxu0 0
  %441 = vmatprep.subr.bf16.mxu0 0
  %442 = vmatpush1.bf16.msra.mxu0 0
  %443 = vmatprep.subr.bf16.mxu0 0
  %444 = vmatpush1.bf16.msra.mxu0 0
  %445 = vmatprep.subr.bf16.mxu0 0
  %446 = vmatpush1.bf16.msra.mxu0 0
  %447 = vmatprep.subr.bf16.mxu0 0
  %448 = vmatpush1.bf16.msra.mxu0 0
  %449 = vmatprep.subr.bf16.mxu0 0
  %450 = vmatpush1.bf16.msra.mxu0 0
  %451 = vmatprep.subr.bf16.mxu0 0
  %452 = vmatpush1.bf16.msra.mxu0 0
  %453 = vmatprep.subr.bf16.mxu0 0
  %454 = vmatpush1.bf16.msra.mxu0 0
  %455 = vmatprep.mubr.bf16.mxu0 0
  %456 = vmatmul.mubr.bf16.gmra.mrb[0].mxu0 %v421
  %v457 = vpop.f32.mrb[0].mxu0
  %v458 = vadd.f32 0.0, %v457
  %v459 = vpop.f32.mrb[0].mxu0
  %v460 = vpop.f32.mrb[0].mxu0
  %v461 = vpop.f32.mrb[0].mxu0
  %462 = vdwg.mxu0
  %v463 = vadd.f32 %v411, %v458
  %v464 = vxor.u32 %v463, 2147483648
  %v465 = vmul.f32 %v464, 1.442695
  %v466 = vpow.pop %v465
  %v467 = vadd.f32 %v466, 1.0
  %v468 = vrcp.pop %v467
  %v469 = vmul.f32 1.0, %v468
  %v470 = vtanh.pop %v463
  %v471 = vmul.f32 %v469, %v291
  %473 = vrot.lane.b32.xlu0 %v470, 64
  %v474 = vpop.permute.xlu0 %473
  %v476 = vmul.f32 %v469, %v474
  %478 = vrot.lane.b32.xlu0 %v476, 32
  %v479 = vpop.permute.xlu0 %478
  %v481 = vadd.f32 %v471, %v479
  %v482 = vtanh.pop %v481
  %484 = vrot.lane.b32.xlu0 %v482, 64
  %v485 = vpop.permute.xlu0 %484
  %v487 = vmul.f32 %v469, %v485
  %488 = vset.pattern.permute.xlu0 2
  %489 = vperm.xlu0 %488, %v53
  %v490 = vpop.permute.xlu0 %489
  %v492 = vmul.f32 %v490, %v65
  %v493 = vadd.f32 %v492, %v72
  %494 = vmatprep.subr.bf16.mxu0 0
  %495 = vmatpush1.bf16.msra.mxu0 %v83
  %496 = vmatprep.subr.bf16.mxu0 0
  %497 = vmatpush1.bf16.msra.mxu0 %v84
  %498 = vmatprep.subr.bf16.mxu0 0
  %499 = vmatpush1.bf16.msra.mxu0 0
  %500 = vmatprep.subr.bf16.mxu0 0
  %501 = vmatpush1.bf16.msra.mxu0 0
  %502 = vmatprep.subr.bf16.mxu0 0
  %503 = vmatpush1.bf16.msra.mxu0 0
  %504 = vmatprep.subr.bf16.mxu0 0
  %505 = vmatpush1.bf16.msra.mxu0 0
  %506 = vmatprep.subr.bf16.mxu0 0
  %507 = vmatpush1.bf16.msra.mxu0 0
  %508 = vmatprep.subr.bf16.mxu0 0
  %509 = vmatpush1.bf16.msra.mxu0 0
  %510 = vmatprep.subr.bf16.mxu0 0
  %511 = vmatpush1.bf16.msra.mxu0 0
  %512 = vmatprep.subr.bf16.mxu0 0
  %513 = vmatpush1.bf16.msra.mxu0 0
  %514 = vmatprep.subr.bf16.mxu0 0
  %515 = vmatpush1.bf16.msra.mxu0 0
  %516 = vmatprep.subr.bf16.mxu0 0
  %517 = vmatpush1.bf16.msra.mxu0 0
  %518 = vmatprep.subr.bf16.mxu0 0
  %519 = vmatpush1.bf16.msra.mxu0 0
  %520 = vmatprep.subr.bf16.mxu0 0
  %521 = vmatpush1.bf16.msra.mxu0 0
  %522 = vmatprep.subr.bf16.mxu0 0
  %523 = vmatpush1.bf16.msra.mxu0 0
  %524 = vmatprep.subr.bf16.mxu0 0
  %525 = vmatpush1.bf16.msra.mxu0 0
  %526 = vmatprep.mubr.bf16.mxu0 0
  %527 = vmatmul.mubr.bf16.gmra.mrb[0].mxu0 %v374
  %v528 = vpop.f32.mrb[0].mxu0
  %v529 = vadd.f32 0.0, %v528
  %v530 = vpop.f32.mrb[0].mxu0
  %v531 = vpop.f32.mrb[0].mxu0
  %v532 = vpop.f32.mrb[0].mxu0
  %533 = vdwg.mxu0
  %v534 = vadd.f32 %v493, %v529
  %v535 = vxor.u32 %v534, 2147483648
  %v536 = vmul.f32 %v535, 1.442695
  %v537 = vpow.pop %v536
  %v538 = vadd.f32 %v537, 1.0
  %v539 = vrcp.pop %v538
  %v540 = vmul.f32 1.0, %v539
  %v541 = vtanh.pop %v534
  %v542 = vmul.f32 %v540, %v362
  %544 = vrot.lane.b32.xlu0 %v541, 64
  %v545 = vpop.permute.xlu0 %544
  %v547 = vmul.f32 %v540, %v545
  %549 = vrot.lane.b32.xlu0 %v547, 32
  %v550 = vpop.permute.xlu0 %549
  %v552 = vadd.f32 %v542, %v550
  %v553 = vtanh.pop %v552
  %555 = vrot.lane.b32.xlu0 %v553, 64
  %v556 = vpop.permute.xlu0 %555
  %v558 = vmul.f32 %v540, %v556
  %v559 = vpack.c.bf16 %v558, %v558
  %561 = vrot.lane.b32.xlu0 %v559, 32
  %v562 = vpop.permute.xlu0 %561
  %v564 = vsel %vm87, %v562, 0
  %566 = vmatprep.subr.bf16.mxu0 0
  %567 = vmatpush1.bf16.msra.mxu0 %v174
  %568 = vmatprep.subr.bf16.mxu0 0
  %569 = vmatpush1.bf16.msra.mxu0 %v175
  %570 = vmatprep.subr.bf16.mxu0 0
  %571 = vmatpush1.bf16.msra.mxu0 0
  %572 = vmatprep.subr.bf16.mxu0 0
  %573 = vmatpush1.bf16.msra.mxu0 0
  %574 = vmatprep.subr.bf16.mxu0 0
  %575 = vmatpush1.bf16.msra.mxu0 0
  %576 = vmatprep.subr.bf16.mxu0 0
  %577 = vmatpush1.bf16.msra.mxu0 0
  %578 = vmatprep.subr.bf16.mxu0 0
  %579 = vmatpush1.bf16.msra.mxu0 0
  %580 = vmatprep.subr.bf16.mxu0 0
  %581 = vmatpush1.bf16.msra.mxu0 0
  %582 = vmatprep.subr.bf16.mxu0 0
  %583 = vmatpush1.bf16.msra.mxu0 0
  %584 = vmatprep.subr.bf16.mxu0 0
  %585 = vmatpush1.bf16.msra.mxu0 0
  %586 = vmatprep.subr.bf16.mxu0 0
  %587 = vmatpush1.bf16.msra.mxu0 0
  %588 = vmatprep.subr.bf16.mxu0 0
  %589 = vmatpush1.bf16.msra.mxu0 0
  %590 = vmatprep.subr.bf16.mxu0 0
  %591 = vmatpush1.bf16.msra.mxu0 0
  %592 = vmatprep.subr.bf16.mxu0 0
  %593 = vmatpush1.bf16.msra.mxu0 0
  %594 = vmatprep.subr.bf16.mxu0 0
  %595 = vmatpush1.bf16.msra.mxu0 0
  %596 = vmatprep.subr.bf16.mxu0 0
  %597 = vmatpush1.bf16.msra.mxu0 0
  %598 = vmatprep.mubr.bf16.mxu0 0
  %599 = vmatmul.mubr.bf16.gmra.mrb[0].mxu0 %v564
  %v600 = vpop.f32.mrb[0].mxu0
  %v601 = vadd.f32 %v161, %v600
  %v602 = vpop.f32.mrb[0].mxu0
  %v603 = vpop.f32.mrb[0].mxu0
  %v604 = vpop.f32.mrb[0].mxu0
  %605 = vdwg.mxu0
  %v606 = vpack.c.bf16 %v487, %v487
  %608 = vrot.lane.b32.xlu0 %v606, 32
  %v609 = vpop.permute.xlu0 %608
  %v611 = vsel %vm87, %v609, 0
  %613 = vmatprep.subr.bf16.mxu0 0
  %614 = vmatpush1.bf16.msra.mxu0 %v229
  %615 = vmatprep.subr.bf16.mxu0 0
  %616 = vmatpush1.bf16.msra.mxu0 %v230
  %617 = vmatprep.subr.bf16.mxu0 0
  %618 = vmatpush1.bf16.msra.mxu0 0
  %619 = vmatprep.subr.bf16.mxu0 0
  %620 = vmatpush1.bf16.msra.mxu0 0
  %621 = vmatprep.subr.bf16.mxu0 0
  %622 = vmatpush1.bf16.msra.mxu0 0
  %623 = vmatprep.subr.bf16.mxu0 0
  %624 = vmatpush1.bf16.msra.mxu0 0
  %625 = vmatprep.subr.bf16.mxu0 0
  %626 = vmatpush1.bf16.msra.mxu0 0
  %627 = vmatprep.subr.bf16.mxu0 0
  %628 = vmatpush1.bf16.msra.mxu0 0
  %629 = vmatprep.subr.bf16.mxu0 0
  %630 = vmatpush1.bf16.msra.mxu0 0
  %631 = vmatprep.subr.bf16.mxu0 0
  %632 = vmatpush1.bf16.msra.mxu0 0
  %633 = vmatprep.subr.bf16.mxu0 0
  %634 = vmatpush1.bf16.msra.mxu0 0
  %635 = vmatprep.subr.bf16.mxu0 0
  %636 = vmatpush1.bf16.msra.mxu0 0
  %637 = vmatprep.subr.bf16.mxu0 0
  %638 = vmatpush1.bf16.msra.mxu0 0
  %639 = vmatprep.subr.bf16.mxu0 0
  %640 = vmatpush1.bf16.msra.mxu0 0
  %641 = vmatprep.subr.bf16.mxu0 0
  %642 = vmatpush1.bf16.msra.mxu0 0
  %643 = vmatprep.subr.bf16.mxu0 0
  %644 = vmatpush1.bf16.msra.mxu0 0
  %645 = vmatprep.mubr.bf16.mxu0 0
  %646 = vmatmul.mubr.bf16.gmra.mrb[0].mxu0 %v611
  %v647 = vpop.f32.mrb[0].mxu0
  %v648 = vadd.f32 0.0, %v647
  %v649 = vpop.f32.mrb[0].mxu0
  %v650 = vpop.f32.mrb[0].mxu0
  %v651 = vpop.f32.mrb[0].mxu0
  %652 = vdwg.mxu0
  %v653 = vadd.f32 %v601, %v648
  %v654 = vxor.u32 %v653, 2147483648
  %v655 = vmul.f32 %v654, 1.442695
  %v656 = vpow.pop %v655
  %v657 = vadd.f32 %v656, 1.0
  %v658 = vrcp.pop %v657
  %v659 = vmul.f32 1.0, %v658
  %v660 = vtanh.pop %v653
  %v661 = vmul.f32 %v659, %v481
  %663 = vrot.lane.b32.xlu0 %v660, 64
  %v664 = vpop.permute.xlu0 %663
  %v666 = vmul.f32 %v659, %v664
  %668 = vrot.lane.b32.xlu0 %v666, 32
  %v669 = vpop.permute.xlu0 %668
  %v671 = vadd.f32 %v661, %v669
  %v672 = vtanh.pop %v671
  %674 = vrot.lane.b32.xlu0 %v672, 64
  %v675 = vpop.permute.xlu0 %674
  %v677 = vmul.f32 %v659, %v675
  %678 = vset.pattern.permute.xlu0 3
  %679 = vperm.xlu0 %678, %v53
  %v680 = vpop.permute.xlu0 %679
  %v682 = vmul.f32 %v680, %v65
  %v683 = vadd.f32 %v682, %v72
  %684 = vmatprep.subr.bf16.mxu0 0
  %685 = vmatpush1.bf16.msra.mxu0 %v83
  %686 = vmatprep.subr.bf16.mxu0 0
  %687 = vmatpush1.bf16.msra.mxu0 %v84
  %688 = vmatprep.subr.bf16.mxu0 0
  %689 = vmatpush1.bf16.msra.mxu0 0
  %690 = vmatprep.subr.bf16.mxu0 0
  %691 = vmatpush1.bf16.msra.mxu0 0
  %692 = vmatprep.subr.bf16.mxu0 0
  %693 = vmatpush1.bf16.msra.mxu0 0
  %694 = vmatprep.subr.bf16.mxu0 0
  %695 = vmatpush1.bf16.msra.mxu0 0
  %696 = vmatprep.subr.bf16.mxu0 0
  %697 = vmatpush1.bf16.msra.mxu0 0
  %698 = vmatprep.subr.bf16.mxu0 0
  %699 = vmatpush1.bf16.msra.mxu0 0
  %700 = vmatprep.subr.bf16.mxu0 0
  %701 = vmatpush1.bf16.msra.mxu0 0
  %702 = vmatprep.subr.bf16.mxu0 0
  %703 = vmatpush1.bf16.msra.mxu0 0
  %704 = vmatprep.subr.bf16.mxu0 0
  %705 = vmatpush1.bf16.msra.mxu0 0
  %706 = vmatprep.subr.bf16.mxu0 0
  %707 = vmatpush1.bf16.msra.mxu0 0
  %708 = vmatprep.subr.bf16.mxu0 0
  %709 = vmatpush1.bf16.msra.mxu0 0
  %710 = vmatprep.subr.bf16.mxu0 0
  %711 = vmatpush1.bf16.msra.mxu0 0
  %712 = vmatprep.subr.bf16.mxu0 0
  %713 = vmatpush1.bf16.msra.mxu0 0
  %714 = vmatprep.subr.bf16.mxu0 0
  %715 = vmatpush1.bf16.msra.mxu0 0
  %716 = vmatprep.mubr.bf16.mxu0 0
  %717 = vmatmul.mubr.bf16.gmra.mrb[0].mxu0 %v564
  %v718 = vpop.f32.mrb[0].mxu0
  %v719 = vadd.f32 0.0, %v718
  %v720 = vpop.f32.mrb[0].mxu0
  %v721 = vpop.f32.mrb[0].mxu0
  %v722 = vpop.f32.mrb[0].mxu0
  %723 = vdwg.mxu0
  %v724 = vadd.f32 %v683, %v719
  %v725 = vxor.u32 %v724, 2147483648
  %v726 = vmul.f32 %v725, 1.442695
  %v727 = vpow.pop %v726
  %v728 = vadd.f32 %v727, 1.0
  %v729 = vrcp.pop %v728
  %v730 = vmul.f32 1.0, %v729
  %v731 = vtanh.pop %v724
  %v732 = vmul.f32 %v730, %v552
  %734 = vrot.lane.b32.xlu0 %v731, 64
  %v735 = vpop.permute.xlu0 %734
  %v737 = vmul.f32 %v730, %v735
  %739 = vrot.lane.b32.xlu0 %v737, 32
  %v740 = vpop.permute.xlu0 %739
  %v742 = vadd.f32 %v732, %v740
  %v743 = vtanh.pop %v742
  %745 = vrot.lane.b32.xlu0 %v743, 64
  %v746 = vpop.permute.xlu0 %745
  %v748 = vmul.f32 %v730, %v746
  %v749 = vpack.c.bf16 %v748, %v748
  %751 = vrot.lane.b32.xlu0 %v749, 32
  %v752 = vpop.permute.xlu0 %751
  %v754 = vsel %vm87, %v752, 0
  %756 = vmatprep.subr.bf16.mxu0 0
  %757 = vmatpush1.bf16.msra.mxu0 %v174
  %758 = vmatprep.subr.bf16.mxu0 0
  %759 = vmatpush1.bf16.msra.mxu0 %v175
  %760 = vmatprep.subr.bf16.mxu0 0
  %761 = vmatpush1.bf16.msra.mxu0 0
  %762 = vmatprep.subr.bf16.mxu0 0
  %763 = vmatpush1.bf16.msra.mxu0 0
  %764 = vmatprep.subr.bf16.mxu0 0
  %765 = vmatpush1.bf16.msra.mxu0 0
  %766 = vmatprep.subr.bf16.mxu0 0
  %767 = vmatpush1.bf16.msra.mxu0 0
  %768 = vmatprep.subr.bf16.mxu0 0
  %769 = vmatpush1.bf16.msra.mxu0 0
  %770 = vmatprep.subr.bf16.mxu0 0
  %771 = vmatpush1.bf16.msra.mxu0 0
  %772 = vmatprep.subr.bf16.mxu0 0
  %773 = vmatpush1.bf16.msra.mxu0 0
  %774 = vmatprep.subr.bf16.mxu0 0
  %775 = vmatpush1.bf16.msra.mxu0 0
  %776 = vmatprep.subr.bf16.mxu0 0
  %777 = vmatpush1.bf16.msra.mxu0 0
  %778 = vmatprep.subr.bf16.mxu0 0
  %779 = vmatpush1.bf16.msra.mxu0 0
  %780 = vmatprep.subr.bf16.mxu0 0
  %781 = vmatpush1.bf16.msra.mxu0 0
  %782 = vmatprep.subr.bf16.mxu0 0
  %783 = vmatpush1.bf16.msra.mxu0 0
  %784 = vmatprep.subr.bf16.mxu0 0
  %785 = vmatpush1.bf16.msra.mxu0 0
  %786 = vmatprep.subr.bf16.mxu0 0
  %787 = vmatpush1.bf16.msra.mxu0 0
  %788 = vmatprep.mubr.bf16.mxu0 0
  %789 = vmatmul.mubr.bf16.gmra.mrb[0].mxu0 %v754
  %v790 = vpop.f32.mrb[0].mxu0
  %v791 = vadd.f32 %v161, %v790
  %v792 = vpop.f32.mrb[0].mxu0
  %v793 = vpop.f32.mrb[0].mxu0
  %v794 = vpop.f32.mrb[0].mxu0
  %795 = vdwg.mxu0
  %v796 = vpack.c.bf16 %v677, %v677
  %798 = vrot.lane.b32.xlu0 %v796, 32
  %v799 = vpop.permute.xlu0 %798
  %v801 = vsel %vm87, %v799, 0
  %803 = vmatprep.subr.bf16.mxu0 0
  %804 = vmatpush1.bf16.msra.mxu0 %v229
  %805 = vmatprep.subr.bf16.mxu0 0
  %806 = vmatpush1.bf16.msra.mxu0 %v230
  %807 = vmatprep.subr.bf16.mxu0 0
  %808 = vmatpush1.bf16.msra.mxu0 0
  %809 = vmatprep.subr.bf16.mxu0 0
  %810 = vmatpush1.bf16.msra.mxu0 0
  %811 = vmatprep.subr.bf16.mxu0 0
  %812 = vmatpush1.bf16.msra.mxu0 0
  %813 = vmatprep.subr.bf16.mxu0 0
  %814 = vmatpush1.bf16.msra.mxu0 0
  %815 = vmatprep.subr.bf16.mxu0 0
  %816 = vmatpush1.bf16.msra.mxu0 0
  %817 = vmatprep.subr.bf16.mxu0 0
  %818 = vmatpush1.bf16.msra.mxu0 0
  %819 = vmatprep.subr.bf16.mxu0 0
  %820 = vmatpush1.bf16.msra.mxu0 0
  %821 = vmatprep.subr.bf16.mxu0 0
  %822 = vmatpush1.bf16.msra.mxu0 0
  %823 = vmatprep.subr.bf16.mxu0 0
  %824 = vmatpush1.bf16.msra.mxu0 0
  %825 = vmatprep.subr.bf16.mxu0 0
  %826 = vmatpush1.bf16.msra.mxu0 0
  %827 = vmatprep.subr.bf16.mxu0 0
  %828 = vmatpush1.bf16.msra.mxu0 0
  %829 = vmatprep.subr.bf16.mxu0 0
  %830 = vmatpush1.bf16.msra.mxu0 0
  %831 = vmatprep.subr.bf16.mxu0 0
  %832 = vmatpush1.bf16.msra.mxu0 0
  %833 = vmatprep.subr.bf16.mxu0 0
  %834 = vmatpush1.bf16.msra.mxu0 0
  %835 = vmatprep.mubr.bf16.mxu0 0
  %836 = vmatmul.mubr.bf16.gmra.mrb[0].mxu0 %v801
  %v837 = vpop.f32.mrb[0].mxu0
  %v838 = vadd.f32 0.0, %v837
  %v839 = vpop.f32.mrb[0].mxu0
  %v840 = vpop.f32.mrb[0].mxu0
  %v841 = vpop.f32.mrb[0].mxu0
  %842 = vdwg.mxu0
  %v843 = vadd.f32 %v791, %v838
  %v844 = vxor.u32 %v843, 2147483648
  %v845 = vmul.f32 %v844, 1.442695
  %v846 = vpow.pop %v845
  %v847 = vadd.f32 %v846, 1.0
  %v848 = vrcp.pop %v847
  %v849 = vmul.f32 1.0, %v848
  %v850 = vtanh.pop %v843
  %v851 = vmul.f32 %v849, %v671
  %853 = vrot.lane.b32.xlu0 %v850, 64
  %v854 = vpop.permute.xlu0 %853
  %v856 = vmul.f32 %v849, %v854
  %858 = vrot.lane.b32.xlu0 %v856, 32
  %v859 = vpop.permute.xlu0 %858
  %v861 = vadd.f32 %v851, %v859
  %v862 = vtanh.pop %v861
  %864 = vrot.lane.b32.xlu0 %v862, 64
  %v865 = vpop.permute.xlu0 %864
  %v867 = vmul.f32 %v849, %v865
  %868 = vset.pattern.permute.xlu0 4
  %869 = vperm.xlu0 %868, %v53
  %v870 = vpop.permute.xlu0 %869
  %v872 = vmul.f32 %v870, %v65
  %v873 = vadd.f32 %v872, %v72
  %874 = vmatprep.subr.bf16.mxu0 0
  %875 = vmatpush1.bf16.msra.mxu0 %v83
  %876 = vmatprep.subr.bf16.mxu0 0
  %877 = vmatpush1.bf16.msra.mxu0 %v84
  %878 = vmatprep.subr.bf16.mxu0 0
  %879 = vmatpush1.bf16.msra.mxu0 0
  %880 = vmatprep.subr.bf16.mxu0 0
  %881 = vmatpush1.bf16.msra.mxu0 0
  %882 = vmatprep.subr.bf16.mxu0 0
  %883 = vmatpush1.bf16.msra.mxu0 0
  %884 = vmatprep.subr.bf16.mxu0 0
  %885 = vmatpush1.bf16.msra.mxu0 0
  %886 = vmatprep.subr.bf16.mxu0 0
  %887 = vmatpush1.bf16.msra.mxu0 0
  %888 = vmatprep.subr.bf16.mxu0 0
  %889 = vmatpush1.bf16.msra.mxu0 0
  %890 = vmatprep.subr.bf16.mxu0 0
  %891 = vmatpush1.bf16.msra.mxu0 0
  %892 = vmatprep.subr.bf16.mxu0 0
  %893 = vmatpush1.bf16.msra.mxu0 0
  %894 = vmatprep.subr.bf16.mxu0 0
  %895 = vmatpush1.bf16.msra.mxu0 0
  %896 = vmatprep.subr.bf16.mxu0 0
  %897 = vmatpush1.bf16.msra.mxu0 0
  %898 = vmatprep.subr.bf16.mxu0 0
  %899 = vmatpush1.bf16.msra.mxu0 0
  %900 = vmatprep.subr.bf16.mxu0 0
  %901 = vmatpush1.bf16.msra.mxu0 0
  %902 = vmatprep.subr.bf16.mxu0 0
  %903 = vmatpush1.bf16.msra.mxu0 0
  %904 = vmatprep.subr.bf16.mxu0 0
  %905 = vmatpush1.bf16.msra.mxu0 0
  %906 = vmatprep.mubr.bf16.mxu0 0
  %907 = vmatmul.mubr.bf16.gmra.mrb[0].mxu0 %v754
  %v908 = vpop.f32.mrb[0].mxu0
  %v909 = vadd.f32 0.0, %v908
  %v910 = vpop.f32.mrb[0].mxu0
  %v911 = vpop.f32.mrb[0].mxu0
  %v912 = vpop.f32.mrb[0].mxu0
  %913 = vdwg.mxu0
  %v914 = vadd.f32 %v873, %v909
  %v915 = vxor.u32 %v914, 2147483648
  %v916 = vmul.f32 %v915, 1.442695
  %v917 = vpow.pop %v916
  %v918 = vadd.f32 %v917, 1.0
  %v919 = vrcp.pop %v918
  %v920 = vmul.f32 1.0, %v919
  %v921 = vtanh.pop %v914
  %v922 = vmul.f32 %v920, %v742
  %924 = vrot.lane.b32.xlu0 %v921, 64
  %v925 = vpop.permute.xlu0 %924
  %v927 = vmul.f32 %v920, %v925
  %929 = vrot.lane.b32.xlu0 %v927, 32
  %v930 = vpop.permute.xlu0 %929
  %v932 = vadd.f32 %v922, %v930
  %v933 = vtanh.pop %v932
  %935 = vrot.lane.b32.xlu0 %v933, 64
  %v936 = vpop.permute.xlu0 %935
  %v938 = vmul.f32 %v920, %v936
  %v939 = vpack.c.bf16 %v938, %v938
  %941 = vrot.lane.b32.xlu0 %v939, 32
  %v942 = vpop.permute.xlu0 %941
  %v944 = vsel %vm87, %v942, 0
  %946 = vmatprep.subr.bf16.mxu0 0
  %947 = vmatpush1.bf16.msra.mxu0 %v174
  %948 = vmatprep.subr.bf16.mxu0 0
  %949 = vmatpush1.bf16.msra.mxu0 %v175
  %950 = vmatprep.subr.bf16.mxu0 0
  %951 = vmatpush1.bf16.msra.mxu0 0
  %952 = vmatprep.subr.bf16.mxu0 0
  %953 = vmatpush1.bf16.msra.mxu0 0
  %954 = vmatprep.subr.bf16.mxu0 0
  %955 = vmatpush1.bf16.msra.mxu0 0
  %956 = vmatprep.subr.bf16.mxu0 0
  %957 = vmatpush1.bf16.msra.mxu0 0
  %958 = vmatprep.subr.bf16.mxu0 0
  %959 = vmatpush1.bf16.msra.mxu0 0
  %960 = vmatprep.subr.bf16.mxu0 0
  %961 = vmatpush1.bf16.msra.mxu0 0
  %962 = vmatprep.subr.bf16.mxu0 0
  %963 = vmatpush1.bf16.msra.mxu0 0
  %964 = vmatprep.subr.bf16.mxu0 0
  %965 = vmatpush1.bf16.msra.mxu0 0
  %966 = vmatprep.subr.bf16.mxu0 0
  %967 = vmatpush1.bf16.msra.mxu0 0
  %968 = vmatprep.subr.bf16.mxu0 0
  %969 = vmatpush1.bf16.msra.mxu0 0
  %970 = vmatprep.subr.bf16.mxu0 0
  %971 = vmatpush1.bf16.msra.mxu0 0
  %972 = vmatprep.subr.bf16.mxu0 0
  %973 = vmatpush1.bf16.msra.mxu0 0
  %974 = vmatprep.subr.bf16.mxu0 0
  %975 = vmatpush1.bf16.msra.mxu0 0
  %976 = vmatprep.subr.bf16.mxu0 0
  %977 = vmatpush1.bf16.msra.mxu0 0
  %978 = vmatprep.mubr.bf16.mxu0 0
  %979 = vmatmul.mubr.bf16.gmra.mrb[0].mxu0 %v944
  %v980 = vpop.f32.mrb[0].mxu0
  %v981 = vadd.f32 %v161, %v980
  %v982 = vpop.f32.mrb[0].mxu0
  %v983 = vpop.f32.mrb[0].mxu0
  %v984 = vpop.f32.mrb[0].mxu0
  %985 = vdwg.mxu0
  %v986 = vpack.c.bf16 %v867, %v867
  %988 = vrot.lane.b32.xlu0 %v986, 32
  %v989 = vpop.permute.xlu0 %988
  %v991 = vsel %vm87, %v989, 0
  %993 = vmatprep.subr.bf16.mxu0 0
  %994 = vmatpush1.bf16.msra.mxu0 %v229
  %995 = vmatprep.subr.bf16.mxu0 0
  %996 = vmatpush1.bf16.msra.mxu0 %v230
  %997 = vmatprep.subr.bf16.mxu0 0
  %998 = vmatpush1.bf16.msra.mxu0 0
  %999 = vmatprep.subr.bf16.mxu0 0
  %1000 = vmatpush1.bf16.msra.mxu0 0
  %1001 = vmatprep.subr.bf16.mxu0 0
  %1002 = vmatpush1.bf16.msra.mxu0 0
  %1003 = vmatprep.subr.bf16.mxu0 0
  %1004 = vmatpush1.bf16.msra.mxu0 0
  %1005 = vmatprep.subr.bf16.mxu0 0
  %1006 = vmatpush1.bf16.msra.mxu0 0
  %1007 = vmatprep.subr.bf16.mxu0 0
  %1008 = vmatpush1.bf16.msra.mxu0 0
  %1009 = vmatprep.subr.bf16.mxu0 0
  %1010 = vmatpush1.bf16.msra.mxu0 0
  %1011 = vmatprep.subr.bf16.mxu0 0
  %1012 = vmatpush1.bf16.msra.mxu0 0
  %1013 = vmatprep.subr.bf16.mxu0 0
  %1014 = vmatpush1.bf16.msra.mxu0 0
  %1015 = vmatprep.subr.bf16.mxu0 0
  %1016 = vmatpush1.bf16.msra.mxu0 0
  %1017 = vmatprep.subr.bf16.mxu0 0
  %1018 = vmatpush1.bf16.msra.mxu0 0
  %1019 = vmatprep.subr.bf16.mxu0 0
  %1020 = vmatpush1.bf16.msra.mxu0 0
  %1021 = vmatprep.subr.bf16.mxu0 0
  %1022 = vmatpush1.bf16.msra.mxu0 0
  %1023 = vmatprep.subr.bf16.mxu0 0
  %1024 = vmatpush1.bf16.msra.mxu0 0
  %1025 = vmatprep.mubr.bf16.mxu0 0
  %1026 = vmatmul.mubr.bf16.gmra.mrb[0].mxu0 %v991
  %v1027 = vpop.f32.mrb[0].mxu0
  %v1028 = vadd.f32 0.0, %v1027
  %v1029 = vpop.f32.mrb[0].mxu0
  %v1030 = vpop.f32.mrb[0].mxu0
  %v1031 = vpop.f32.mrb[0].mxu0
  %1032 = vdwg.mxu0
  %v1033 = vadd.f32 %v981, %v1028
  %v1034 = vxor.u32 %v1033, 2147483648
  %v1035 = vmul.f32 %v1034, 1.442695
  %v1036 = vpow.pop %v1035
  %v1037 = vadd.f32 %v1036, 1.0
  %v1038 = vrcp.pop %v1037
  %v1039 = vmul.f32 1.0, %v1038
  %v1040 = vtanh.pop %v1033
  %v1041 = vmul.f32 %v1039, %v861
  %1043 = vrot.lane.b32.xlu0 %v1040, 64
  %v1044 = vpop.permute.xlu0 %1043
  %v1046 = vmul.f32 %v1039, %v1044
  %1048 = vrot.lane.b32.xlu0 %v1046, 32
  %v1049 = vpop.permute.xlu0 %1048
  %v1051 = vadd.f32 %v1041, %v1049
  %v1052 = vtanh.pop %v1051
  %1054 = vrot.lane.b32.xlu0 %v1052, 64
  %v1055 = vpop.permute.xlu0 %1054
  %v1057 = vmul.f32 %v1039, %v1055
  %1058 = vset.pattern.permute.xlu0 5
  %1059 = vperm.xlu0 %1058, %v53
  %v1060 = vpop.permute.xlu0 %1059
  %v1062 = vmul.f32 %v1060, %v65
  %v1063 = vadd.f32 %v1062, %v72
  %1064 = vmatprep.subr.bf16.mxu0 0
  %1065 = vmatpush1.bf16.msra.mxu0 %v83
  %1066 = vmatprep.subr.bf16.mxu0 0
  %1067 = vmatpush1.bf16.msra.mxu0 %v84
  %1068 = vmatprep.subr.bf16.mxu0 0
  %1069 = vmatpush1.bf16.msra.mxu0 0
  %1070 = vmatprep.subr.bf16.mxu0 0
  %1071 = vmatpush1.bf16.msra.mxu0 0
  %1072 = vmatprep.subr.bf16.mxu0 0
  %1073 = vmatpush1.bf16.msra.mxu0 0
  %1074 = vmatprep.subr.bf16.mxu0 0
  %1075 = vmatpush1.bf16.msra.mxu0 0
  %1076 = vmatprep.subr.bf16.mxu0 0
  %1077 = vmatpush1.bf16.msra.mxu0 0
  %1078 = vmatprep.subr.bf16.mxu0 0
  %1079 = vmatpush1.bf16.msra.mxu0 0
  %1080 = vmatprep.subr.bf16.mxu0 0
  %1081 = vmatpush1.bf16.msra.mxu0 0
  %1082 = vmatprep.subr.bf16.mxu0 0
  %1083 = vmatpush1.bf16.msra.mxu0 0
  %1084 = vmatprep.subr.bf16.mxu0 0
  %1085 = vmatpush1.bf16.msra.mxu0 0
  %1086 = vmatprep.subr.bf16.mxu0 0
  %1087 = vmatpush1.bf16.msra.mxu0 0
  %1088 = vmatprep.subr.bf16.mxu0 0
  %1089 = vmatpush1.bf16.msra.mxu0 0
  %1090 = vmatprep.subr.bf16.mxu0 0
  %1091 = vmatpush1.bf16.msra.mxu0 0
  %1092 = vmatprep.subr.bf16.mxu0 0
  %1093 = vmatpush1.bf16.msra.mxu0 0
  %1094 = vmatprep.subr.bf16.mxu0 0
  %1095 = vmatpush1.bf16.msra.mxu0 0
  %1096 = vmatprep.mubr.bf16.mxu0 0
  %1097 = vmatmul.mubr.bf16.gmra.mrb[0].mxu0 %v944
  %v1098 = vpop.f32.mrb[0].mxu0
  %v1099 = vadd.f32 0.0, %v1098
  %v1100 = vpop.f32.mrb[0].mxu0
  %v1101 = vpop.f32.mrb[0].mxu0
  %v1102 = vpop.f32.mrb[0].mxu0
  %1103 = vdwg.mxu0
  %v1104 = vadd.f32 %v1063, %v1099
  %v1105 = vxor.u32 %v1104, 2147483648
  %v1106 = vmul.f32 %v1105, 1.442695
  %v1107 = vpow.pop %v1106
  %v1108 = vadd.f32 %v1107, 1.0
  %v1109 = vrcp.pop %v1108
  %v1110 = vmul.f32 1.0, %v1109
  %v1111 = vtanh.pop %v1104
  %v1112 = vmul.f32 %v1110, %v932
  %1114 = vrot.lane.b32.xlu0 %v1111, 64
  %v1115 = vpop.permute.xlu0 %1114
  %v1117 = vmul.f32 %v1110, %v1115
  %1119 = vrot.lane.b32.xlu0 %v1117, 32
  %v1120 = vpop.permute.xlu0 %1119
  %v1122 = vadd.f32 %v1112, %v1120
  %v1123 = vtanh.pop %v1122
  %1125 = vrot.lane.b32.xlu0 %v1123, 64
  %v1126 = vpop.permute.xlu0 %1125
  %v1128 = vmul.f32 %v1110, %v1126
  %v1129 = vpack.c.bf16 %v1128, %v1128
  %1131 = vrot.lane.b32.xlu0 %v1129, 32
  %v1132 = vpop.permute.xlu0 %1131
  %v1134 = vsel %vm87, %v1132, 0
  %1136 = vmatprep.subr.bf16.mxu0 0
  %1137 = vmatpush1.bf16.msra.mxu0 %v174
  %1138 = vmatprep.subr.bf16.mxu0 0
  %1139 = vmatpush1.bf16.msra.mxu0 %v175
  %1140 = vmatprep.subr.bf16.mxu0 0
  %1141 = vmatpush1.bf16.msra.mxu0 0
  %1142 = vmatprep.subr.bf16.mxu0 0
  %1143 = vmatpush1.bf16.msra.mxu0 0
  %1144 = vmatprep.subr.bf16.mxu0 0
  %1145 = vmatpush1.bf16.msra.mxu0 0
  %1146 = vmatprep.subr.bf16.mxu0 0
  %1147 = vmatpush1.bf16.msra.mxu0 0
  %1148 = vmatprep.subr.bf16.mxu0 0
  %1149 = vmatpush1.bf16.msra.mxu0 0
  %1150 = vmatprep.subr.bf16.mxu0 0
  %1151 = vmatpush1.bf16.msra.mxu0 0
  %1152 = vmatprep.subr.bf16.mxu0 0
  %1153 = vmatpush1.bf16.msra.mxu0 0
  %1154 = vmatprep.subr.bf16.mxu0 0
  %1155 = vmatpush1.bf16.msra.mxu0 0
  %1156 = vmatprep.subr.bf16.mxu0 0
  %1157 = vmatpush1.bf16.msra.mxu0 0
  %1158 = vmatprep.subr.bf16.mxu0 0
  %1159 = vmatpush1.bf16.msra.mxu0 0
  %1160 = vmatprep.subr.bf16.mxu0 0
  %1161 = vmatpush1.bf16.msra.mxu0 0
  %1162 = vmatprep.subr.bf16.mxu0 0
  %1163 = vmatpush1.bf16.msra.mxu0 0
  %1164 = vmatprep.subr.bf16.mxu0 0
  %1165 = vmatpush1.bf16.msra.mxu0 0
  %1166 = vmatprep.subr.bf16.mxu0 0
  %1167 = vmatpush1.bf16.msra.mxu0 0
  %1168 = vmatprep.mubr.bf16.mxu0 0
  %1169 = vmatmul.mubr.bf16.gmra.mrb[0].mxu0 %v1134
  %v1170 = vpop.f32.mrb[0].mxu0
  %v1171 = vadd.f32 %v161, %v1170
  %v1172 = vpop.f32.mrb[0].mxu0
  %v1173 = vpop.f32.mrb[0].mxu0
  %v1174 = vpop.f32.mrb[0].mxu0
  %1175 = vdwg.mxu0
  %v1176 = vpack.c.bf16 %v1057, %v1057
  %1178 = vrot.lane.b32.xlu0 %v1176, 32
  %v1179 = vpop.permute.xlu0 %1178
  %v1181 = vsel %vm87, %v1179, 0
  %1183 = vmatprep.subr.bf16.mxu0 0
  %1184 = vmatpush1.bf16.msra.mxu0 %v229
  %1185 = vmatprep.subr.bf16.mxu0 0
  %1186 = vmatpush1.bf16.msra.mxu0 %v230
  %1187 = vmatprep.subr.bf16.mxu0 0
  %1188 = vmatpush1.bf16.msra.mxu0 0
  %1189 = vmatprep.subr.bf16.mxu0 0
  %1190 = vmatpush1.bf16.msra.mxu0 0
  %1191 = vmatprep.subr.bf16.mxu0 0
  %1192 = vmatpush1.bf16.msra.mxu0 0
  %1193 = vmatprep.subr.bf16.mxu0 0
  %1194 = vmatpush1.bf16.msra.mxu0 0
  %1195 = vmatprep.subr.bf16.mxu0 0
  %1196 = vmatpush1.bf16.msra.mxu0 0
  %1197 = vmatprep.subr.bf16.mxu0 0
  %1198 = vmatpush1.bf16.msra.mxu0 0
  %1199 = vmatprep.subr.bf16.mxu0 0
  %1200 = vmatpush1.bf16.msra.mxu0 0
  %1201 = vmatprep.subr.bf16.mxu0 0
  %1202 = vmatpush1.bf16.msra.mxu0 0
  %1203 = vmatprep.subr.bf16.mxu0 0
  %1204 = vmatpush1.bf16.msra.mxu0 0
  %1205 = vmatprep.subr.bf16.mxu0 0
  %1206 = vmatpush1.bf16.msra.mxu0 0
  %1207 = vmatprep.subr.bf16.mxu0 0
  %1208 = vmatpush1.bf16.msra.mxu0 0
  %1209 = vmatprep.subr.bf16.mxu0 0
  %1210 = vmatpush1.bf16.msra.mxu0 0
  %1211 = vmatprep.subr.bf16.mxu0 0
  %1212 = vmatpush1.bf16.msra.mxu0 0
  %1213 = vmatprep.subr.bf16.mxu0 0
  %1214 = vmatpush1.bf16.msra.mxu0 0
  %1215 = vmatprep.mubr.bf16.mxu0 0
  %1216 = vmatmul.mubr.bf16.gmra.mrb[0].mxu0 %v1181
  %v1217 = vpop.f32.mrb[0].mxu0
  %v1218 = vadd.f32 0.0, %v1217
  %v1219 = vpop.f32.mrb[0].mxu0
  %v1220 = vpop.f32.mrb[0].mxu0
  %v1221 = vpop.f32.mrb[0].mxu0
  %1222 = vdwg.mxu0
  %v1223 = vadd.f32 %v1171, %v1218
  %v1224 = vxor.u32 %v1223, 2147483648
  %v1225 = vmul.f32 %v1224, 1.442695
  %v1226 = vpow.pop %v1225
  %v1227 = vadd.f32 %v1226, 1.0
  %v1228 = vrcp.pop %v1227
  %v1229 = vmul.f32 1.0, %v1228
  %v1230 = vtanh.pop %v1223
  %v1231 = vmul.f32 %v1229, %v1051
  %1233 = vrot.lane.b32.xlu0 %v1230, 64
  %v1234 = vpop.permute.xlu0 %1233
  %v1236 = vmul.f32 %v1229, %v1234
  %1238 = vrot.lane.b32.xlu0 %v1236, 32
  %v1239 = vpop.permute.xlu0 %1238
  %v1241 = vadd.f32 %v1231, %v1239
  %v1242 = vtanh.pop %v1241
  %1244 = vrot.lane.b32.xlu0 %v1242, 64
  %v1245 = vpop.permute.xlu0 %1244
  %v1247 = vmul.f32 %v1229, %v1245
  %1248 = vset.pattern.permute.xlu0 6
  %1249 = vperm.xlu0 %1248, %v53
  %v1250 = vpop.permute.xlu0 %1249
  %v1252 = vmul.f32 %v1250, %v65
  %v1253 = vadd.f32 %v1252, %v72
  %1254 = vmatprep.subr.bf16.mxu0 0
  %1255 = vmatpush1.bf16.msra.mxu0 %v83
  %1256 = vmatprep.subr.bf16.mxu0 0
  %1257 = vmatpush1.bf16.msra.mxu0 %v84
  %1258 = vmatprep.subr.bf16.mxu0 0
  %1259 = vmatpush1.bf16.msra.mxu0 0
  %1260 = vmatprep.subr.bf16.mxu0 0
  %1261 = vmatpush1.bf16.msra.mxu0 0
  %1262 = vmatprep.subr.bf16.mxu0 0
  %1263 = vmatpush1.bf16.msra.mxu0 0
  %1264 = vmatprep.subr.bf16.mxu0 0
  %1265 = vmatpush1.bf16.msra.mxu0 0
  %1266 = vmatprep.subr.bf16.mxu0 0
  %1267 = vmatpush1.bf16.msra.mxu0 0
  %1268 = vmatprep.subr.bf16.mxu0 0
  %1269 = vmatpush1.bf16.msra.mxu0 0
  %1270 = vmatprep.subr.bf16.mxu0 0
  %1271 = vmatpush1.bf16.msra.mxu0 0
  %1272 = vmatprep.subr.bf16.mxu0 0
  %1273 = vmatpush1.bf16.msra.mxu0 0
  %1274 = vmatprep.subr.bf16.mxu0 0
  %1275 = vmatpush1.bf16.msra.mxu0 0
  %1276 = vmatprep.subr.bf16.mxu0 0
  %1277 = vmatpush1.bf16.msra.mxu0 0
  %1278 = vmatprep.subr.bf16.mxu0 0
  %1279 = vmatpush1.bf16.msra.mxu0 0
  %1280 = vmatprep.subr.bf16.mxu0 0
  %1281 = vmatpush1.bf16.msra.mxu0 0
  %1282 = vmatprep.subr.bf16.mxu0 0
  %1283 = vmatpush1.bf16.msra.mxu0 0
  %1284 = vmatprep.subr.bf16.mxu0 0
  %1285 = vmatpush1.bf16.msra.mxu0 0
  %1286 = vmatprep.mubr.bf16.mxu0 0
  %1287 = vmatmul.mubr.bf16.gmra.mrb[0].mxu0 %v1134
  %v1288 = vpop.f32.mrb[0].mxu0
  %v1289 = vadd.f32 0.0, %v1288
  %v1290 = vpop.f32.mrb[0].mxu0
  %v1291 = vpop.f32.mrb[0].mxu0
  %v1292 = vpop.f32.mrb[0].mxu0
  %1293 = vdwg.mxu0
  %v1294 = vadd.f32 %v1253, %v1289
  %v1295 = vxor.u32 %v1294, 2147483648
  %v1296 = vmul.f32 %v1295, 1.442695
  %v1297 = vpow.pop %v1296
  %v1298 = vadd.f32 %v1297, 1.0
  %v1299 = vrcp.pop %v1298
  %v1300 = vmul.f32 1.0, %v1299
  %v1301 = vtanh.pop %v1294
  %v1302 = vmul.f32 %v1300, %v1122
  %1304 = vrot.lane.b32.xlu0 %v1301, 64
  %v1305 = vpop.permute.xlu0 %1304
  %v1307 = vmul.f32 %v1300, %v1305
  %1309 = vrot.lane.b32.xlu0 %v1307, 32
  %v1310 = vpop.permute.xlu0 %1309
  %v1312 = vadd.f32 %v1302, %v1310
  %v1313 = vtanh.pop %v1312
  %1315 = vrot.lane.b32.xlu0 %v1313, 64
  %v1316 = vpop.permute.xlu0 %1315
  %v1318 = vmul.f32 %v1300, %v1316
  %v1319 = vpack.c.bf16 %v1318, %v1318
  %1321 = vrot.lane.b32.xlu0 %v1319, 32
  %v1322 = vpop.permute.xlu0 %1321
  %v1324 = vsel %vm87, %v1322, 0
  %1326 = vmatprep.subr.bf16.mxu0 0
  %1327 = vmatpush1.bf16.msra.mxu0 %v174
  %1328 = vmatprep.subr.bf16.mxu0 0
  %1329 = vmatpush1.bf16.msra.mxu0 %v175
  %1330 = vmatprep.subr.bf16.mxu0 0
  %1331 = vmatpush1.bf16.msra.mxu0 0
  %1332 = vmatprep.subr.bf16.mxu0 0
  %1333 = vmatpush1.bf16.msra.mxu0 0
  %1334 = vmatprep.subr.bf16.mxu0 0
  %1335 = vmatpush1.bf16.msra.mxu0 0
  %1336 = vmatprep.subr.bf16.mxu0 0
  %1337 = vmatpush1.bf16.msra.mxu0 0
  %1338 = vmatprep.subr.bf16.mxu0 0
  %1339 = vmatpush1.bf16.msra.mxu0 0
  %1340 = vmatprep.subr.bf16.mxu0 0
  %1341 = vmatpush1.bf16.msra.mxu0 0
  %1342 = vmatprep.subr.bf16.mxu0 0
  %1343 = vmatpush1.bf16.msra.mxu0 0
  %1344 = vmatprep.subr.bf16.mxu0 0
  %1345 = vmatpush1.bf16.msra.mxu0 0
  %1346 = vmatprep.subr.bf16.mxu0 0
  %1347 = vmatpush1.bf16.msra.mxu0 0
  %1348 = vmatprep.subr.bf16.mxu0 0
  %1349 = vmatpush1.bf16.msra.mxu0 0
  %1350 = vmatprep.subr.bf16.mxu0 0
  %1351 = vmatpush1.bf16.msra.mxu0 0
  %1352 = vmatprep.subr.bf16.mxu0 0
  %1353 = vmatpush1.bf16.msra.mxu0 0
  %1354 = vmatprep.subr.bf16.mxu0 0
  %1355 = vmatpush1.bf16.msra.mxu0 0
  %1356 = vmatprep.subr.bf16.mxu0 0
  %1357 = vmatpush1.bf16.msra.mxu0 0
  %1358 = vmatprep.mubr.bf16.mxu0 0
  %1359 = vmatmul.mubr.bf16.gmra.mrb[0].mxu0 %v1324
  %v1360 = vpop.f32.mrb[0].mxu0
  %v1361 = vadd.f32 %v161, %v1360
  %v1362 = vpop.f32.mrb[0].mxu0
  %v1363 = vpop.f32.mrb[0].mxu0
  %v1364 = vpop.f32.mrb[0].mxu0
  %1365 = vdwg.mxu0
  %v1366 = vpack.c.bf16 %v1247, %v1247
  %1368 = vrot.lane.b32.xlu0 %v1366, 32
  %v1369 = vpop.permute.xlu0 %1368
  %v1371 = vsel %vm87, %v1369, 0
  %1373 = vmatprep.subr.bf16.mxu0 0
  %1374 = vmatpush1.bf16.msra.mxu0 %v229
  %1375 = vmatprep.subr.bf16.mxu0 0
  %1376 = vmatpush1.bf16.msra.mxu0 %v230
  %1377 = vmatprep.subr.bf16.mxu0 0
  %1378 = vmatpush1.bf16.msra.mxu0 0
  %1379 = vmatprep.subr.bf16.mxu0 0
  %1380 = vmatpush1.bf16.msra.mxu0 0
  %1381 = vmatprep.subr.bf16.mxu0 0
  %1382 = vmatpush1.bf16.msra.mxu0 0
  %1383 = vmatprep.subr.bf16.mxu0 0
  %1384 = vmatpush1.bf16.msra.mxu0 0
  %1385 = vmatprep.subr.bf16.mxu0 0
  %1386 = vmatpush1.bf16.msra.mxu0 0
  %1387 = vmatprep.subr.bf16.mxu0 0
  %1388 = vmatpush1.bf16.msra.mxu0 0
  %1389 = vmatprep.subr.bf16.mxu0 0
  %1390 = vmatpush1.bf16.msra.mxu0 0
  %1391 = vmatprep.subr.bf16.mxu0 0
  %1392 = vmatpush1.bf16.msra.mxu0 0
  %1393 = vmatprep.subr.bf16.mxu0 0
  %1394 = vmatpush1.bf16.msra.mxu0 0
  %1395 = vmatprep.subr.bf16.mxu0 0
  %1396 = vmatpush1.bf16.msra.mxu0 0
  %1397 = vmatprep.subr.bf16.mxu0 0
  %1398 = vmatpush1.bf16.msra.mxu0 0
  %1399 = vmatprep.subr.bf16.mxu0 0
  %1400 = vmatpush1.bf16.msra.mxu0 0
  %1401 = vmatprep.subr.bf16.mxu0 0
  %1402 = vmatpush1.bf16.msra.mxu0 0
  %1403 = vmatprep.subr.bf16.mxu0 0
  %1404 = vmatpush1.bf16.msra.mxu0 0
  %1405 = vmatprep.mubr.bf16.mxu0 0
  %1406 = vmatmul.mubr.bf16.gmra.mrb[0].mxu0 %v1371
  %v1407 = vpop.f32.mrb[0].mxu0
  %v1408 = vadd.f32 0.0, %v1407
  %v1409 = vpop.f32.mrb[0].mxu0
  %v1410 = vpop.f32.mrb[0].mxu0
  %v1411 = vpop.f32.mrb[0].mxu0
  %1412 = vdwg.mxu0
  %v1413 = vadd.f32 %v1361, %v1408
  %v1414 = vxor.u32 %v1413, 2147483648
  %v1415 = vmul.f32 %v1414, 1.442695
  %v1416 = vpow.pop %v1415
  %v1417 = vadd.f32 %v1416, 1.0
  %v1418 = vrcp.pop %v1417
  %v1419 = vmul.f32 1.0, %v1418
  %v1420 = vtanh.pop %v1413
  %v1421 = vmul.f32 %v1419, %v1241
  %1423 = vrot.lane.b32.xlu0 %v1420, 64
  %v1424 = vpop.permute.xlu0 %1423
  %v1426 = vmul.f32 %v1419, %v1424
  %1428 = vrot.lane.b32.xlu0 %v1426, 32
  %v1429 = vpop.permute.xlu0 %1428
  %v1431 = vadd.f32 %v1421, %v1429
  %v1432 = vtanh.pop %v1431
  %1434 = vrot.lane.b32.xlu0 %v1432, 64
  %v1435 = vpop.permute.xlu0 %1434
  %v1437 = vmul.f32 %v1419, %v1435
  %1438 = vset.pattern.permute.xlu0 7
  %1439 = vperm.xlu0 %1438, %v53
  %v1440 = vpop.permute.xlu0 %1439
  %v1442 = vmul.f32 %v1440, %v65
  %v1443 = vadd.f32 %v1442, %v72
  %1444 = vmatprep.subr.bf16.mxu0 0
  %1445 = vmatpush1.bf16.msra.mxu0 %v83
  %1446 = vmatprep.subr.bf16.mxu0 0
  %1447 = vmatpush1.bf16.msra.mxu0 %v84
  %1448 = vmatprep.subr.bf16.mxu0 0
  %1449 = vmatpush1.bf16.msra.mxu0 0
  %1450 = vmatprep.subr.bf16.mxu0 0
  %1451 = vmatpush1.bf16.msra.mxu0 0
  %1452 = vmatprep.subr.bf16.mxu0 0
  %1453 = vmatpush1.bf16.msra.mxu0 0
  %1454 = vmatprep.subr.bf16.mxu0 0
  %1455 = vmatpush1.bf16.msra.mxu0 0
  %1456 = vmatprep.subr.bf16.mxu0 0
  %1457 = vmatpush1.bf16.msra.mxu0 0
  %1458 = vmatprep.subr.bf16.mxu0 0
  %1459 = vmatpush1.bf16.msra.mxu0 0
  %1460 = vmatprep.subr.bf16.mxu0 0
  %1461 = vmatpush1.bf16.msra.mxu0 0
  %1462 = vmatprep.subr.bf16.mxu0 0
  %1463 = vmatpush1.bf16.msra.mxu0 0
  %1464 = vmatprep.subr.bf16.mxu0 0
  %1465 = vmatpush1.bf16.msra.mxu0 0
  %1466 = vmatprep.subr.bf16.mxu0 0
  %1467 = vmatpush1.bf16.msra.mxu0 0
  %1468 = vmatprep.subr.bf16.mxu0 0
  %1469 = vmatpush1.bf16.msra.mxu0 0
  %1470 = vmatprep.subr.bf16.mxu0 0
  %1471 = vmatpush1.bf16.msra.mxu0 0
  %1472 = vmatprep.subr.bf16.mxu0 0
  %1473 = vmatpush1.bf16.msra.mxu0 0
  %1474 = vmatprep.subr.bf16.mxu0 0
  %1475 = vmatpush1.bf16.msra.mxu0 0
  %1476 = vmatprep.mubr.bf16.mxu0 0
  %1477 = vmatmul.mubr.bf16.gmra.mrb[0].mxu0 %v1324
  %v1478 = vpop.f32.mrb[0].mxu0
  %v1479 = vadd.f32 0.0, %v1478
  %v1480 = vpop.f32.mrb[0].mxu0
  %v1481 = vpop.f32.mrb[0].mxu0
  %v1482 = vpop.f32.mrb[0].mxu0
  %1483 = vdwg.mxu0
  %v1484 = vadd.f32 %v1443, %v1479
  %v1485 = vxor.u32 %v1484, 2147483648
  %v1486 = vmul.f32 %v1485, 1.442695
  %v1487 = vpow.pop %v1486
  %v1488 = vadd.f32 %v1487, 1.0
  %v1489 = vrcp.pop %v1488
  %v1490 = vmul.f32 1.0, %v1489
  %v1491 = vtanh.pop %v1484
  %v1492 = vmul.f32 %v1490, %v1312
  %1494 = vrot.lane.b32.xlu0 %v1491, 64
  %v1495 = vpop.permute.xlu0 %1494
  %v1497 = vmul.f32 %v1490, %v1495
  %1499 = vrot.lane.b32.xlu0 %v1497, 32
  %v1500 = vpop.permute.xlu0 %1499
  %v1502 = vadd.f32 %v1492, %v1500
  %v1503 = vtanh.pop %v1502
  %1505 = vrot.lane.b32.xlu0 %v1503, 64
  %v1506 = vpop.permute.xlu0 %1505
  %v1508 = vmul.f32 %v1490, %v1506
  %v1509 = vpack.c.bf16 %v1508, %v1508
  %1511 = vrot.lane.b32.xlu0 %v1509, 32
  %v1512 = vpop.permute.xlu0 %1511
  %v1514 = vsel %vm87, %v1512, 0
  %1516 = vmatprep.subr.bf16.mxu0 0
  %1517 = vmatpush1.bf16.msra.mxu0 %v174
  %1518 = vmatprep.subr.bf16.mxu0 0
  %1519 = vmatpush1.bf16.msra.mxu0 %v175
  %1520 = vmatprep.subr.bf16.mxu0 0
  %1521 = vmatpush1.bf16.msra.mxu0 0
  %1522 = vmatprep.subr.bf16.mxu0 0
  %1523 = vmatpush1.bf16.msra.mxu0 0
  %1524 = vmatprep.subr.bf16.mxu0 0
  %1525 = vmatpush1.bf16.msra.mxu0 0
  %1526 = vmatprep.subr.bf16.mxu0 0
  %1527 = vmatpush1.bf16.msra.mxu0 0
  %1528 = vmatprep.subr.bf16.mxu0 0
  %1529 = vmatpush1.bf16.msra.mxu0 0
  %1530 = vmatprep.subr.bf16.mxu0 0
  %1531 = vmatpush1.bf16.msra.mxu0 0
  %1532 = vmatprep.subr.bf16.mxu0 0
  %1533 = vmatpush1.bf16.msra.mxu0 0
  %1534 = vmatprep.subr.bf16.mxu0 0
  %1535 = vmatpush1.bf16.msra.mxu0 0
  %1536 = vmatprep.subr.bf16.mxu0 0
  %1537 = vmatpush1.bf16.msra.mxu0 0
  %1538 = vmatprep.subr.bf16.mxu0 0
  %1539 = vmatpush1.bf16.msra.mxu0 0
  %1540 = vmatprep.subr.bf16.mxu0 0
  %1541 = vmatpush1.bf16.msra.mxu0 0
  %1542 = vmatprep.subr.bf16.mxu0 0
  %1543 = vmatpush1.bf16.msra.mxu0 0
  %1544 = vmatprep.subr.bf16.mxu0 0
  %1545 = vmatpush1.bf16.msra.mxu0 0
  %1546 = vmatprep.subr.bf16.mxu0 0
  %1547 = vmatpush1.bf16.msra.mxu0 0
  %1548 = vmatprep.mubr.bf16.mxu0 0
  %1549 = vmatmul.mubr.bf16.gmra.mrb[0].mxu0 %v1514
  %v1550 = vpop.f32.mrb[0].mxu0
  %v1551 = vadd.f32 %v161, %v1550
  %v1552 = vpop.f32.mrb[0].mxu0
  %v1553 = vpop.f32.mrb[0].mxu0
  %v1554 = vpop.f32.mrb[0].mxu0
  %1555 = vdwg.mxu0
  %v1556 = vpack.c.bf16 %v1437, %v1437
  %1558 = vrot.lane.b32.xlu0 %v1556, 32
  %v1559 = vpop.permute.xlu0 %1558
  %v1561 = vsel %vm87, %v1559, 0
  %1563 = vmatprep.subr.bf16.mxu0 0
  %1564 = vmatpush1.bf16.msra.mxu0 %v229
  %1565 = vmatprep.subr.bf16.mxu0 0
  %1566 = vmatpush1.bf16.msra.mxu0 %v230
  %1567 = vmatprep.subr.bf16.mxu0 0
  %1568 = vmatpush1.bf16.msra.mxu0 0
  %1569 = vmatprep.subr.bf16.mxu0 0
  %1570 = vmatpush1.bf16.msra.mxu0 0
  %1571 = vmatprep.subr.bf16.mxu0 0
  %1572 = vmatpush1.bf16.msra.mxu0 0
  %1573 = vmatprep.subr.bf16.mxu0 0
  %1574 = vmatpush1.bf16.msra.mxu0 0
  %1575 = vmatprep.subr.bf16.mxu0 0
  %1576 = vmatpush1.bf16.msra.mxu0 0
  %1577 = vmatprep.subr.bf16.mxu0 0
  %1578 = vmatpush1.bf16.msra.mxu0 0
  %1579 = vmatprep.subr.bf16.mxu0 0
  %1580 = vmatpush1.bf16.msra.mxu0 0
  %1581 = vmatprep.subr.bf16.mxu0 0
  %1582 = vmatpush1.bf16.msra.mxu0 0
  %1583 = vmatprep.subr.bf16.mxu0 0
  %1584 = vmatpush1.bf16.msra.mxu0 0
  %1585 = vmatprep.subr.bf16.mxu0 0
  %1586 = vmatpush1.bf16.msra.mxu0 0
  %1587 = vmatprep.subr.bf16.mxu0 0
  %1588 = vmatpush1.bf16.msra.mxu0 0
  %1589 = vmatprep.subr.bf16.mxu0 0
  %1590 = vmatpush1.bf16.msra.mxu0 0
  %1591 = vmatprep.subr.bf16.mxu0 0
  %1592 = vmatpush1.bf16.msra.mxu0 0
  %1593 = vmatprep.subr.bf16.mxu0 0
  %1594 = vmatpush1.bf16.msra.mxu0 0
  %1595 = vmatprep.mubr.bf16.mxu0 0
  %1596 = vmatmul.mubr.bf16.gmra.mrb[0].mxu0 %v1561
  %v1597 = vpop.f32.mrb[0].mxu0
  %v1598 = vadd.f32 0.0, %v1597
  %v1599 = vpop.f32.mrb[0].mxu0
  %v1600 = vpop.f32.mrb[0].mxu0
  %v1601 = vpop.f32.mrb[0].mxu0
  %1602 = vdwg.mxu0
  %v1603 = vadd.f32 %v1551, %v1598
  %v1604 = vxor.u32 %v1603, 2147483648
  %v1605 = vmul.f32 %v1604, 1.442695
  %v1606 = vpow.pop %v1605
  %v1607 = vadd.f32 %v1606, 1.0
  %v1608 = vrcp.pop %v1607
  %v1609 = vmul.f32 1.0, %v1608
  %v1610 = vtanh.pop %v1603
  %v1611 = vmul.f32 %v1609, %v1431
  %1613 = vrot.lane.b32.xlu0 %v1610, 64
  %v1614 = vpop.permute.xlu0 %1613
  %v1616 = vmul.f32 %v1609, %v1614
  %1618 = vrot.lane.b32.xlu0 %v1616, 32
  %v1619 = vpop.permute.xlu0 %1618
  %v1621 = vadd.f32 %v1611, %v1619
  %v1622 = vtanh.pop %v1621
  %1624 = vrot.lane.b32.xlu0 %v1622, 64
  %v1625 = vpop.permute.xlu0 %1624
  %v1627 = vmul.f32 %v1609, %v1625
  %v1629 = vlaneseq
  %v1630 = vshrl.u32 %v1629, 7
  %v1631 = vsub.s32 0, %v1630
  %v1632 = vrot.slane %v52, %v1631
  %1635 = vrot.lane.b32.xlu0 %v1627, 32
  %v1636 = vpop.permute.xlu0 %1635
  %v1637 = vsel %vm87, %v1636, 0
  %1639 = vmatprep.subr.mxu0 0.0
  %1640 = vmatpush1.msra.mxu0 %v48
  %1641 = vmatprep.subr.mxu0 0.0
  %1642 = vmatpush1.msra.mxu0 %v49
  %1643 = vmatprep.subr.mxu0 0.0
  %1644 = vmatpush1.msra.mxu0 %v50
  %1645 = vmatprep.subr.mxu0 0.0
  %1646 = vmatpush1.msra.mxu0 %v51
  %1647 = vmatprep.subr.mxu0 0.0
  %1648 = vmatpush1.msra.mxu0 0.0
  %1649 = vmatprep.subr.mxu0 0.0
  %1650 = vmatpush1.msra.mxu0 0.0
  %1651 = vmatprep.subr.mxu0 0.0
  %1652 = vmatpush1.msra.mxu0 0.0
  %1653 = vmatprep.subr.mxu0 0.0
  %1654 = vmatpush1.msra.mxu0 0.0
  %1655 = vmatprep.subr.mxu0 0.0
  %1656 = vmatpush1.msra.mxu0 0.0
  %1657 = vmatprep.subr.mxu0 0.0
  %1658 = vmatpush1.msra.mxu0 0.0
  %1659 = vmatprep.subr.mxu0 0.0
  %1660 = vmatpush1.msra.mxu0 0.0
  %1661 = vmatprep.subr.mxu0 0.0
  %1662 = vmatpush1.msra.mxu0 0.0
  %1663 = vmatprep.subr.mxu0 0.0
  %1664 = vmatpush1.msra.mxu0 0.0
  %1665 = vmatprep.subr.mxu0 0.0
  %1666 = vmatpush1.msra.mxu0 0.0
  %1667 = vmatprep.subr.mxu0 0.0
  %1668 = vmatpush1.msra.mxu0 0.0
  %1669 = vmatprep.subr.mxu0 0.0
  %1670 = vmatpush1.msra.mxu0 0.0
  %1671 = vmatprep.subr.mxu0 0.0
  %1672 = vmatpush1.msra.mxu0 0.0
  %1673 = vmatprep.subr.mxu0 0.0
  %1674 = vmatpush1.msra.mxu0 0.0
  %1675 = vmatprep.subr.mxu0 0.0
  %1676 = vmatpush1.msra.mxu0 0.0
  %1677 = vmatprep.subr.mxu0 0.0
  %1678 = vmatpush1.msra.mxu0 0.0
  %1679 = vmatprep.subr.mxu0 0.0
  %1680 = vmatpush1.msra.mxu0 0.0
  %1681 = vmatprep.subr.mxu0 0.0
  %1682 = vmatpush1.msra.mxu0 0.0
  %1683 = vmatprep.subr.mxu0 0.0
  %1684 = vmatpush1.msra.mxu0 0.0
  %1685 = vmatprep.subr.mxu0 0.0
  %1686 = vmatpush1.msra.mxu0 0.0
  %1687 = vmatprep.subr.mxu0 0.0
  %1688 = vmatpush1.msra.mxu0 0.0
  %1689 = vmatprep.subr.mxu0 0.0
  %1690 = vmatpush1.msra.mxu0 0.0
  %1691 = vmatprep.subr.mxu0 0.0
  %1692 = vmatpush1.msra.mxu0 0.0
  %1693 = vmatprep.subr.mxu0 0.0
  %1694 = vmatpush1.msra.mxu0 0.0
  %1695 = vmatprep.subr.mxu0 0.0
  %1696 = vmatpush1.msra.mxu0 0.0
  %1697 = vmatprep.subr.mxu0 0.0
  %1698 = vmatpush1.msra.mxu0 0.0
  %1699 = vmatprep.subr.mxu0 0.0
  %1700 = vmatpush1.msra.mxu0 0.0
  %1701 = vmatprep.subr.mxu0 0.0
  %1702 = vmatpush1.msra.mxu0 0.0
  %1703 = vmatprep.mubr.f32.mxu0 0.0
  %1704 = vmatmul.mubr.f32.gmra.mrb[0].mxu0 %v1637
  %v1705 = vpop.f32.mrb[0].mxu0
  %v1706 = vadd.f32 %v1632, %v1705
  %v1707 = vpop.f32.mrb[0].mxu0
  %1708 = vdwg.mxu0
  %vm1709 = vcmask 1024
  %1710 = vst.msk [vmem:[%s9] sm:$0x3] %vm1709, %v1706
  // Predicated region
  $region38: #{rnn_forward.1} parent=0 // pred_check
    _
  $region39: #{rnn_forward.1} parent=0 // pred_check_branch
    %1712 = sbr.rel (0) target = $region41
  $region40: #{rnn_forward.1} parent=0 // pred_region
    _
  $region41: #{rnn_forward.1} parent=0 // pred_fallthru
    _
  // Predicated region
  $region42: #{rnn_forward.1} parent=0 // pred_check
    _
  $region43: #{rnn_forward.1} parent=0 // pred_check_branch
    %1714 = sbr.rel (0) target = $region45
  $region44: #{rnn_forward.1} parent=0 // pred_region
    _
  $region45: #{rnn_forward.1} parent=0 // pred_fallthru
    _

</llo_original>
